<compile_context>
chip_gen: v6e
topology: v6e:2x2x1
jax: 0.10.0
libtpu: 0.0.40
codegen_flags: <defaults>
</compile_context>

<pallas_src>
import functools

import jax
import jax.numpy as jnp
from jax.experimental import pallas as pl
from jax.experimental.pallas import tpu as pltpu


def _round_up(n, m):
    return (n + m - 1) // m * m


_X_RESIDENT_BYTES = 4 * 1024 * 1024     # keep X fully VMEM-resident below this
_VMEM_LIMIT_BYTES = 48 * 1024 * 1024    # fits v7x 64 MiB physical; fine on v5e/v6e


# ---------------------------------------------------------------------------
# Kernels: one SAGEConv layer, tiled over (row-block i, reduction-block k).
#   acc[i,:]  = sum_k A_counts[i,k] @ X[k,:]
#   agg       = acc * inv_deg                    (f32 mean normalization)
#   out[i,:]  = agg @ W_l^T + X[i] @ W_r^T + b   (optional ReLU)
# ---------------------------------------------------------------------------
def _sage_kernel_resident(a_ref, x_ref, invdeg_ref, w_ref, b_ref, o_ref, acc_ref,
                          *, relu, tm, tk, cp):
    """X fully VMEM-resident; agg rows and root rows sliced from the same buffer."""
    i = pl.program_id(0)
    k = pl.program_id(1)

    @pl.when(k == 0)
    def _():
        acc_ref[...] = jnp.zeros_like(acc_ref)

    # Aggregation partial product on the MXU (bf16 operands, f32 accumulate).
    xk = x_ref[pl.ds(pl.multiple_of(k * tk, tk), tk), :]
    acc_ref[...] += jnp.dot(a_ref[...], xk, preferred_element_type=jnp.float32)

    @pl.when(k == pl.num_programs(1) - 1)
    def _():
        # 1/deg scaling in f32 (A holds exact integer counts).
        agg = (acc_ref[...] * invdeg_ref[...]).astype(jnp.bfloat16)     # [tm, cp]
        xi = x_ref[pl.ds(pl.multiple_of(i * tm, tm), tm), :]            # root rows
        # Two dots against static slices of the resident stacked weights
        # (avoids materializing a (tm, 2*cp) concat copy in the epilogue).
        out = (jnp.dot(agg, w_ref[:cp, :], preferred_element_type=jnp.float32)
               + jnp.dot(xi, w_ref[cp:, :], preferred_element_type=jnp.float32)
               + b_ref[...])
        if relu:
            out = jnp.maximum(out, 0.0)
        o_ref[...] = out.astype(o_ref.dtype)


def _sage_kernel_streamed(a_ref, xk_ref, xi_ref, invdeg_ref, w_ref, b_ref, o_ref,
                          acc_ref, *, relu, cp):
    """Fallback for graphs too large to keep X VMEM-resident."""
    k = pl.program_id(1)

    @pl.when(k == 0)
    def _():
        acc_ref[...] = jnp.zeros_like(acc_ref)

    acc_ref[...] += jnp.dot(a_ref[...], xk_ref[...],
                            preferred_element_type=jnp.float32)

    @pl.when(k == pl.num_programs(1) - 1)
    def _():
        agg = (acc_ref[...] * invdeg_ref[...]).astype(jnp.bfloat16)
        out = (jnp.dot(agg, w_ref[:cp, :], preferred_element_type=jnp.float32)
               + jnp.dot(xi_ref[...], w_ref[cp:, :], preferred_element_type=jnp.float32)
               + b_ref[...])
        if relu:
            out = jnp.maximum(out, 0.0)
        o_ref[...] = out.astype(o_ref.dtype)


def _sage_layer(a, x, inv_deg, w_stack, b_pad, *, relu, out_dtype, tm, tk):
    """One tiled SAGEConv layer.
    a:[Np,Np] bf16 counts, x:[Np,Cp] bf16, inv_deg:[Np,1] f32,
    w_stack:[2*Cp,Coutp] bf16, b_pad:[1,Coutp] f32 -> [Np,Coutp] out_dtype."""
    np_, cp = x.shape
    two_cp, coutp = w_stack.shape
    grid = (np_ // tm, np_ // tk)
    resident_x = x.size * x.dtype.itemsize <= _X_RESIDENT_BYTES

    flops = 2 * np_ * np_ * cp + 2 * np_ * two_cp * coutp
    x_reads = 1 if resident_x else (np_ // tm + 1)     # include re-stream factor
    bytes_accessed = (a.size * a.dtype.itemsize
                      + x_reads * x.size * x.dtype.itemsize
                      + inv_deg.size * inv_deg.dtype.itemsize
                      + w_stack.size * w_stack.dtype.itemsize
                      + np_ * coutp * jnp.dtype(out_dtype).itemsize)

    a_spec = pl.BlockSpec((tm, tk), lambda i, k: (i, k))              # A tile
    invdeg_spec = pl.BlockSpec((tm, 1), lambda i, k: (i, 0))          # 1/deg rows
    w_spec = pl.BlockSpec((two_cp, coutp), lambda i, k: (0, 0))       # resident W
    b_spec = pl.BlockSpec((1, coutp), lambda i, k: (0, 0))            # resident bias
    out_spec = pl.BlockSpec((tm, coutp), lambda i, k: (i, 0))

    if resident_x:
        kernel = functools.partial(_sage_kernel_resident,
                                   relu=relu, tm=tm, tk=tk, cp=cp)
        in_specs = [a_spec,
                    pl.BlockSpec((np_, cp), lambda i, k: (0, 0)),     # X resident
                    invdeg_spec, w_spec, b_spec]
        args = (a, x, inv_deg, w_stack, b_pad)
    else:
        kernel = functools.partial(_sage_kernel_streamed, relu=relu, cp=cp)
        in_specs = [a_spec,
                    pl.BlockSpec((tk, cp), lambda i, k: (k, 0)),      # X rows (agg)
                    pl.BlockSpec((tm, cp), lambda i, k: (i, 0)),      # X rows (root)
                    invdeg_spec, w_spec, b_spec]
        args = (a, x, x, inv_deg, w_stack, b_pad)

    return pl.pallas_call(
        kernel,
        out_shape=jax.ShapeDtypeStruct((np_, coutp), out_dtype),
        grid_spec=pltpu.PrefetchScalarGridSpec(
            num_scalar_prefetch=0,
            grid=grid,
            in_specs=in_specs,
            out_specs=out_spec,
            scratch_shapes=[pltpu.VMEM((tm, cp), jnp.float32)],
        ),
        compiler_params=pltpu.CompilerParams(
            dimension_semantics=("parallel", "arbitrary"),
            vmem_limit_bytes=_VMEM_LIMIT_BYTES,
        ),
        cost_estimate=pl.CostEstimate(
            flops=flops, transcendentals=0, bytes_accessed=bytes_accessed),
    )(*args)


# ---------------------------------------------------------------------------
# Glue: adjacency counts + inverse degree, parameter packing.
# ---------------------------------------------------------------------------
def _build_adj_and_invdeg(edge_index, np_):
    """A[t, s] = #edges s->t (exact small-integer counts in bf16), built directly
    at the padded shape; degree via O(E) scatter-add (no dense row-sum)."""
    src = edge_index[0]
    dst = edge_index[1]
    a = jnp.zeros((np_, np_), jnp.bfloat16).at[dst, src].add(
        jnp.ones(src.shape, jnp.bfloat16))
    deg = jnp.zeros((np_,), jnp.float32).at[dst].add(1.0)
    inv_deg = (1.0 / jnp.maximum(deg, 1.0)).reshape(np_, 1)   # empty nbhd -> agg = 0
    return a, inv_deg


def _stack_pad_weights(w_l, w_r, cin_p, cout_p):
    """[W_l^T ; W_r^T] zero-padded to [2*cin_p, cout_p], bf16."""
    cout, cin = w_l.shape
    wl_t = jnp.pad(w_l.T, ((0, cin_p - cin), (0, cout_p - cout)))
    wr_t = jnp.pad(w_r.T, ((0, cin_p - cin), (0, cout_p - cout)))
    return jnp.concatenate([wl_t, wr_t], axis=0).astype(jnp.bfloat16)


@functools.partial(jax.jit, static_argnames=("num_nodes",))
def gnn_forward(x, edge_index, params, num_nodes):
    w1l, w1r, b1, w2l, w2r, b2 = params
    fin = x.shape[1]
    hid = w1l.shape[0]
    fout = w2l.shape[0]

    # Tile choice: 512 sits on the ~85% HBM-roofline plateau and fits every
    # generation's VMEM (A tile 0.5 MiB per buffer, well under the 48 MiB limit
    # even on v7x).  Shrink for tiny graphs so padding stays minimal.
    tile = min(512, _round_up(num_nodes, 128))
    np_ = _round_up(num_nodes, tile)
    cin_p = _round_up(fin, 128)
    hid_p = _round_up(hid, 128)
    fout_p = _round_up(fout, 128)

    # Adjacency counts (bf16-exact) + f32 inverse degree for epilogue scaling.
    a, inv_deg = _build_adj_and_invdeg(edge_index, np_)

    x_p = jnp.pad(x.astype(jnp.bfloat16),
                  ((0, np_ - num_nodes), (0, cin_p - fin)))

    w1 = _stack_pad_weights(w1l, w1r, cin_p, hid_p)
    b1p = jnp.pad(b1, (0, hid_p - hid)).reshape(1, hid_p).astype(jnp.float32)
    w2 = _stack_pad_weights(w2l, w2r, hid_p, fout_p)
    b2p = jnp.pad(b2, (0, fout_p - fout)).reshape(1, fout_p).astype(jnp.float32)

    # Layer 1 (+ReLU), intermediate kept bf16 + lane-dense in HBM.
    h1 = _sage_layer(a, x_p, inv_deg, w1, b1p, relu=True,
                     out_dtype=jnp.bfloat16, tm=tile, tk=tile)
    # Layer 2.
    out = _sage_layer(a, h1, inv_deg, w2, b2p, relu=False,
                      out_dtype=jnp.float32, tm=tile, tk=tile)
    return out[:num_nodes, :fout]


def init_params(key, in_channels, hidden_channels, out_channels):
    """Deterministic Glorot-uniform init matching SAGEConv parameter shapes."""
    def glorot(k, shape):
        fan_in, fan_out = shape[1], shape[0]
        lim = jnp.sqrt(6.0 / (fan_in + fan_out))
        return jax.random.uniform(k, shape, jnp.float32, -lim, lim)

    k1, k2, k3, k4 = jax.random.split(key, 4)
    w1l = glorot(k1, (hidden_channels, in_channels))      # conv1.lin_l.weight
    w1r = glorot(k2, (hidden_channels, in_channels))      # conv1.lin_r.weight
    b1 = jnp.zeros((hidden_channels,), jnp.float32)       # conv1.lin_l.bias
    w2l = glorot(k3, (out_channels, hidden_channels))     # conv2.lin_l.weight
    w2r = glorot(k4, (out_channels, hidden_channels))     # conv2.lin_r.weight
    b2 = jnp.zeros((out_channels,), jnp.float32)          # conv2.lin_l.bias
    return (w1l, w1r, b1, w2l, w2r, b2)


if __name__ == "__main__":
    key = jax.random.PRNGKey(0)
    kx, ke, kp = jax.random.split(key, 3)

    num_nodes = 16
    in_channels = 4
    hidden_channels = 32
    out_channels = 8
    num_edges = 40

    x = jax.random.normal(kx, (num_nodes, in_channels), jnp.float32)
    edge_index = jax.random.randint(ke, (2, num_edges), 0, num_nodes, jnp.int32)

    params = init_params(kp, in_channels, hidden_channels, out_channels)

    out = gnn_forward(x, edge_index, params, num_nodes=num_nodes)
    jax.block_until_ready(out)

    assert out.shape == (num_nodes, out_channels)
    assert out.dtype == jnp.float32
    print("KERNEL_OK")
</pallas_src>

<mosaic_0001>
module attributes {stable_mosaic.version = 11 : i64} {
  func.func private @main(%arg0: i32) attributes {dimension_semantics = [#tpu.dimension_semantics<core_parallel>], iteration_bounds = array<i64: 2>, tpu.core_type = #tpu.core_type<sc_scalar_subcore>, window_params = []} {
    return
  }
}

module attributes {stable_mosaic.version = 11 : i64} {
  func.func private @main(%arg0: i32) attributes {dimension_semantics = [#tpu.dimension_semantics<core_parallel>], iteration_bounds = array<i64: 2>, tpu.core_type = #tpu.core_type<sc_scalar_subcore>, window_params = []} {
    return
  }
}

module attributes {stable_mosaic.version = 11 : i64} {
  func.func @_sage_kernel_resident(%arg0: i32, %arg1: i32, %arg2: memref<128x128xbf16, #tpu.memory_space<vmem>>, %arg3: memref<128x128xbf16, #tpu.memory_space<vmem>>, %arg4: memref<128x1xf32, #tpu.memory_space<vmem>>, %arg5: memref<256x128xbf16, #tpu.memory_space<vmem>>, %arg6: memref<1x128xf32, #tpu.memory_space<vmem>>, %arg7: memref<128x128xf32, #tpu.memory_space<vmem>>, %arg8: memref<128x128xf32, #tpu.memory_space<vmem>>) attributes {dimension_semantics = [#tpu.dimension_semantics<parallel>, #tpu.dimension_semantics<arbitrary>], iteration_bounds = array<i64: 1, 1>, scalar_prefetch = 0 : i64, scratch_operands = 1 : i64, tpu.core_type = #tpu.core_type<tc>, window_params = [{transform_indices = @transform_0, window_bounds = array<i64: 128, 128>}, {pipeline_mode = #tpu.pipeline_mode<synchronous>, transform_indices = @transform_1, window_bounds = array<i64: 128, 128>}, {transform_indices = @transform_2, window_bounds = array<i64: 128, 1>}, {pipeline_mode = #tpu.pipeline_mode<synchronous>, transform_indices = @transform_3, window_bounds = array<i64: 256, 128>}, {pipeline_mode = #tpu.pipeline_mode<synchronous>, transform_indices = @transform_4, window_bounds = array<i64: 1, 128>}, {transform_indices = @transform_5, window_bounds = array<i64: 128, 128>}]} {
    %c0_i32 = arith.constant 0 : i32
    %0 = arith.cmpi eq, %arg1, %c0_i32 : i32
    %1 = arith.extui %0 : i1 to i32
    %c0_i32_0 = arith.constant 0 : i32
    %2 = arith.cmpi ne, %1, %c0_i32_0 : i32
    scf.if %2 {
      %cst_9 = arith.constant 0.000000e+00 : f32
      %15 = vector.broadcast %cst_9 : f32 to vector<128x128xf32>
      %c0_10 = arith.constant 0 : index
      %c0_11 = arith.constant 0 : index
      %16 = vector.load %arg8[%c0_10, %c0_11] : memref<128x128xf32, #tpu.memory_space<vmem>>, vector<128x128xf32>
      tpu.vector_store %arg8[%c0_10, %c0_11], %15 {strides = array<i32>} : memref<128x128xf32, #tpu.memory_space<vmem>>, vector<128x128xf32>,
    } else {
    }
    %c128_i32 = arith.constant 128 : i32
    %3 = arith.muli %arg1, %c128_i32 : i32
    %4 = tpu.assume_multiple %3, 128 : i32
    %5 = arith.index_cast %4 : i32 to index
    %c0 = arith.constant 0 : index
    %6 = vector.load %arg3[%5, %c0] : memref<128x128xbf16, #tpu.memory_space<vmem>>, vector<128x128xbf16>
    %c0_1 = arith.constant 0 : index
    %c0_2 = arith.constant 0 : index
    %7 = vector.load %arg8[%c0_1, %c0_2] : memref<128x128xf32, #tpu.memory_space<vmem>>, vector<128x128xf32>
    %c0_3 = arith.constant 0 : index
    %c0_4 = arith.constant 0 : index
    %8 = vector.load %arg2[%c0_3, %c0_4] : memref<128x128xbf16, #tpu.memory_space<vmem>>, vector<128x128xbf16>
    %cst = arith.constant dense<0.000000e+00> : vector<128x128xf32>
    %9 = tpu.matmul %8, %6, %cst {dimension_numbers = #tpu.dot_dimension_numbers<[1], [0], [0], [1], [0, 0, 1, 1], [], []>} : vector<128x128xbf16>, vector<128x128xbf16>, vector<128x128xf32> -> vector<128x128xf32>
    %10 = arith.addf %7, %9 : vector<128x128xf32>
    %c0_5 = arith.constant 0 : index
    %c0_6 = arith.constant 0 : index
    %11 = vector.load %arg8[%c0_5, %c0_6] : memref<128x128xf32, #tpu.memory_space<vmem>>, vector<128x128xf32>
    tpu.vector_store %arg8[%c0_5, %c0_6], %10 {strides = array<i32>} : memref<128x128xf32, #tpu.memory_space<vmem>>, vector<128x128xf32>,
    %c0_i32_7 = arith.constant 0 : i32
    %12 = arith.cmpi eq, %arg1, %c0_i32_7 : i32
    %13 = arith.extui %12 : i1 to i32
    %c0_i32_8 = arith.constant 0 : i32
    %14 = arith.cmpi ne, %13, %c0_i32_8 : i32
    scf.if %14 {
      %c0_9 = arith.constant 0 : index
      %c0_10 = arith.constant 0 : index
      %15 = vector.load %arg8[%c0_9, %c0_10] : memref<128x128xf32, #tpu.memory_space<vmem>>, vector<128x128xf32>
      %c0_11 = arith.constant 0 : index
      %c0_12 = arith.constant 0 : index
      %16 = vector.load %arg4[%c0_11, %c0_12] : memref<128x1xf32, #tpu.memory_space<vmem>>, vector<128x1xf32>
      %17 = vector.broadcast %16 : vector<128x1xf32> to vector<128x128xf32>
      %18 = arith.mulf %15, %17 : vector<128x128xf32>
      %19 = arith.truncf %18 : vector<128x128xf32> to vector<128x128xbf16>
      %c128_i32_13 = arith.constant 128 : i32
      %20 = arith.muli %arg0, %c128_i32_13 : i32
      %21 = tpu.assume_multiple %20, 128 : i32
      %22 = arith.index_cast %21 : i32 to index
      %c0_14 = arith.constant 0 : index
      %23 = vector.load %arg3[%22, %c0_14] : memref<128x128xbf16, #tpu.memory_space<vmem>>, vector<128x128xbf16>
      %c0_15 = arith.constant 0 : index
      %c0_16 = arith.constant 0 : index
      %24 = vector.load %arg5[%c0_15, %c0_16] : memref<256x128xbf16, #tpu.memory_space<vmem>>, vector<128x128xbf16>
      %cst_17 = arith.constant dense<0.000000e+00> : vector<128x128xf32>
      %25 = tpu.matmul %19, %24, %cst_17 {dimension_numbers = #tpu.dot_dimension_numbers<[1], [0], [0], [1], [0, 0, 1, 1], [], []>} : vector<128x128xbf16>, vector<128x128xbf16>, vector<128x128xf32> -> vector<128x128xf32>
      %c128 = arith.constant 128 : index
      %c0_18 = arith.constant 0 : index
      %26 = vector.load %arg5[%c128, %c0_18] : memref<256x128xbf16, #tpu.memory_space<vmem>>, vector<128x128xbf16>
      %cst_19 = arith.constant dense<0.000000e+00> : vector<128x128xf32>
      %27 = tpu.matmul %23, %26, %cst_19 {dimension_numbers = #tpu.dot_dimension_numbers<[1], [0], [0], [1], [0, 0, 1, 1], [], []>} : vector<128x128xbf16>, vector<128x128xbf16>, vector<128x128xf32> -> vector<128x128xf32>
      %28 = arith.addf %25, %27 : vector<128x128xf32>
      %c0_20 = arith.constant 0 : index
      %c0_21 = arith.constant 0 : index
      %29 = vector.load %arg6[%c0_20, %c0_21] : memref<1x128xf32, #tpu.memory_space<vmem>>, vector<1x128xf32>
      %30 = vector.broadcast %29 : vector<1x128xf32> to vector<128x128xf32>
      %31 = arith.addf %28, %30 : vector<128x128xf32>
      %c0_22 = arith.constant 0 : index
      %c0_23 = arith.constant 0 : index
      %32 = vector.load %arg7[%c0_22, %c0_23] : memref<128x128xf32, #tpu.memory_space<vmem>>, vector<128x128xf32>
      tpu.vector_store %arg7[%c0_22, %c0_23], %31 {strides = array<i32>} : memref<128x128xf32, #tpu.memory_space<vmem>>, vector<128x128xf32>,
    } else {
    }
    return
  }
  func.func @transform_0(%arg0: i32, %arg1: i32) -> (i32, i32) {
    %c0_i32 = arith.constant 0 : i32
    return %arg0, %arg1 : i32, i32
  }
  func.func @transform_1(%arg0: i32, %arg1: i32) -> (i32, i32) {
    %c0_i32 = arith.constant 0 : i32
    %c0_i32_0 = arith.constant 0 : i32
    %c0_i32_1 = arith.constant 0 : i32
    return %c0_i32, %c0_i32_0 : i32, i32
  }
  func.func @transform_2(%arg0: i32, %arg1: i32) -> (i32, i32) {
    %c0_i32 = arith.constant 0 : i32
    %c0_i32_0 = arith.constant 0 : i32
    return %arg0, %c0_i32 : i32, i32
  }
  func.func @transform_3(%arg0: i32, %arg1: i32) -> (i32, i32) {
    %c0_i32 = arith.constant 0 : i32
    %c0_i32_0 = arith.constant 0 : i32
    %c0_i32_1 = arith.constant 0 : i32
    return %c0_i32, %c0_i32_0 : i32, i32
  }
  func.func @transform_4(%arg0: i32, %arg1: i32) -> (i32, i32) {
    %c0_i32 = arith.constant 0 : i32
    %c0_i32_0 = arith.constant 0 : i32
    %c0_i32_1 = arith.constant 0 : i32
    return %c0_i32, %c0_i32_0 : i32, i32
  }
  func.func @transform_5(%arg0: i32, %arg1: i32) -> (i32, i32) {
    %c0_i32 = arith.constant 0 : i32
    %c0_i32_0 = arith.constant 0 : i32
    return %arg0, %c0_i32 : i32, i32
  }
}

module attributes {stable_mosaic.version = 11 : i64} {
  func.func @_sage_kernel_resident(%arg0: i32, %arg1: i32, %arg2: memref<128x128xbf16, #tpu.memory_space<vmem>>, %arg3: memref<128x128xbf16, #tpu.memory_space<vmem>>, %arg4: memref<128x1xf32, #tpu.memory_space<vmem>>, %arg5: memref<256x128xbf16, #tpu.memory_space<vmem>>, %arg6: memref<1x128xf32, #tpu.memory_space<vmem>>, %arg7: memref<128x128xbf16, #tpu.memory_space<vmem>>, %arg8: memref<128x128xf32, #tpu.memory_space<vmem>>) attributes {dimension_semantics = [#tpu.dimension_semantics<parallel>, #tpu.dimension_semantics<arbitrary>], iteration_bounds = array<i64: 1, 1>, scalar_prefetch = 0 : i64, scratch_operands = 1 : i64, tpu.core_type = #tpu.core_type<tc>, window_params = [{transform_indices = @transform_0, window_bounds = array<i64: 128, 128>}, {pipeline_mode = #tpu.pipeline_mode<synchronous>, transform_indices = @transform_1, window_bounds = array<i64: 128, 128>}, {transform_indices = @transform_2, window_bounds = array<i64: 128, 1>}, {pipeline_mode = #tpu.pipeline_mode<synchronous>, transform_indices = @transform_3, window_bounds = array<i64: 256, 128>}, {pipeline_mode = #tpu.pipeline_mode<synchronous>, transform_indices = @transform_4, window_bounds = array<i64: 1, 128>}, {transform_indices = @transform_5, window_bounds = array<i64: 128, 128>}]} {
    %c0_i32 = arith.constant 0 : i32
    %0 = arith.cmpi eq, %arg1, %c0_i32 : i32
    %1 = arith.extui %0 : i1 to i32
    %c0_i32_0 = arith.constant 0 : i32
    %2 = arith.cmpi ne, %1, %c0_i32_0 : i32
    scf.if %2 {
      %cst_9 = arith.constant 0.000000e+00 : f32
      %15 = vector.broadcast %cst_9 : f32 to vector<128x128xf32>
      %c0_10 = arith.constant 0 : index
      %c0_11 = arith.constant 0 : index
      %16 = vector.load %arg8[%c0_10, %c0_11] : memref<128x128xf32, #tpu.memory_space<vmem>>, vector<128x128xf32>
      tpu.vector_store %arg8[%c0_10, %c0_11], %15 {strides = array<i32>} : memref<128x128xf32, #tpu.memory_space<vmem>>, vector<128x128xf32>,
    } else {
    }
    %c128_i32 = arith.constant 128 : i32
    %3 = arith.muli %arg1, %c128_i32 : i32
    %4 = tpu.assume_multiple %3, 128 : i32
    %5 = arith.index_cast %4 : i32 to index
    %c0 = arith.constant 0 : index
    %6 = vector.load %arg3[%5, %c0] : memref<128x128xbf16, #tpu.memory_space<vmem>>, vector<128x128xbf16>
    %c0_1 = arith.constant 0 : index
    %c0_2 = arith.constant 0 : index
    %7 = vector.load %arg8[%c0_1, %c0_2] : memref<128x128xf32, #tpu.memory_space<vmem>>, vector<128x128xf32>
    %c0_3 = arith.constant 0 : index
    %c0_4 = arith.constant 0 : index
    %8 = vector.load %arg2[%c0_3, %c0_4] : memref<128x128xbf16, #tpu.memory_space<vmem>>, vector<128x128xbf16>
    %cst = arith.constant dense<0.000000e+00> : vector<128x128xf32>
    %9 = tpu.matmul %8, %6, %cst {dimension_numbers = #tpu.dot_dimension_numbers<[1], [0], [0], [1], [0, 0, 1, 1], [], []>} : vector<128x128xbf16>, vector<128x128xbf16>, vector<128x128xf32> -> vector<128x128xf32>
    %10 = arith.addf %7, %9 : vector<128x128xf32>
    %c0_5 = arith.constant 0 : index
    %c0_6 = arith.constant 0 : index
    %11 = vector.load %arg8[%c0_5, %c0_6] : memref<128x128xf32, #tpu.memory_space<vmem>>, vector<128x128xf32>
    tpu.vector_store %arg8[%c0_5, %c0_6], %10 {strides = array<i32>} : memref<128x128xf32, #tpu.memory_space<vmem>>, vector<128x128xf32>,
    %c0_i32_7 = arith.constant 0 : i32
    %12 = arith.cmpi eq, %arg1, %c0_i32_7 : i32
    %13 = arith.extui %12 : i1 to i32
    %c0_i32_8 = arith.constant 0 : i32
    %14 = arith.cmpi ne, %13, %c0_i32_8 : i32
    scf.if %14 {
      %c0_9 = arith.constant 0 : index
      %c0_10 = arith.constant 0 : index
      %15 = vector.load %arg8[%c0_9, %c0_10] : memref<128x128xf32, #tpu.memory_space<vmem>>, vector<128x128xf32>
      %c0_11 = arith.constant 0 : index
      %c0_12 = arith.constant 0 : index
      %16 = vector.load %arg4[%c0_11, %c0_12] : memref<128x1xf32, #tpu.memory_space<vmem>>, vector<128x1xf32>
      %17 = vector.broadcast %16 : vector<128x1xf32> to vector<128x128xf32>
      %18 = arith.mulf %15, %17 : vector<128x128xf32>
      %19 = arith.truncf %18 : vector<128x128xf32> to vector<128x128xbf16>
      %c128_i32_13 = arith.constant 128 : i32
      %20 = arith.muli %arg0, %c128_i32_13 : i32
      %21 = tpu.assume_multiple %20, 128 : i32
      %22 = arith.index_cast %21 : i32 to index
      %c0_14 = arith.constant 0 : index
      %23 = vector.load %arg3[%22, %c0_14] : memref<128x128xbf16, #tpu.memory_space<vmem>>, vector<128x128xbf16>
      %c0_15 = arith.constant 0 : index
      %c0_16 = arith.constant 0 : index
      %24 = vector.load %arg5[%c0_15, %c0_16] : memref<256x128xbf16, #tpu.memory_space<vmem>>, vector<128x128xbf16>
      %cst_17 = arith.constant dense<0.000000e+00> : vector<128x128xf32>
      %25 = tpu.matmul %19, %24, %cst_17 {dimension_numbers = #tpu.dot_dimension_numbers<[1], [0], [0], [1], [0, 0, 1, 1], [], []>} : vector<128x128xbf16>, vector<128x128xbf16>, vector<128x128xf32> -> vector<128x128xf32>
      %c128 = arith.constant 128 : index
      %c0_18 = arith.constant 0 : index
      %26 = vector.load %arg5[%c128, %c0_18] : memref<256x128xbf16, #tpu.memory_space<vmem>>, vector<128x128xbf16>
      %cst_19 = arith.constant dense<0.000000e+00> : vector<128x128xf32>
      %27 = tpu.matmul %23, %26, %cst_19 {dimension_numbers = #tpu.dot_dimension_numbers<[1], [0], [0], [1], [0, 0, 1, 1], [], []>} : vector<128x128xbf16>, vector<128x128xbf16>, vector<128x128xf32> -> vector<128x128xf32>
      %28 = arith.addf %25, %27 : vector<128x128xf32>
      %c0_20 = arith.constant 0 : index
      %c0_21 = arith.constant 0 : index
      %29 = vector.load %arg6[%c0_20, %c0_21] : memref<1x128xf32, #tpu.memory_space<vmem>>, vector<1x128xf32>
      %30 = vector.broadcast %29 : vector<1x128xf32> to vector<128x128xf32>
      %31 = arith.addf %28, %30 : vector<128x128xf32>
      %cst_22 = arith.constant 0.000000e+00 : f32
      %32 = vector.broadcast %cst_22 : f32 to vector<128x128xf32>
      %33 = arith.maximumf %31, %32 : vector<128x128xf32>
      %34 = arith.truncf %33 : vector<128x128xf32> to vector<128x128xbf16>
      %c0_23 = arith.constant 0 : index
      %c0_24 = arith.constant 0 : index
      %35 = vector.load %arg7[%c0_23, %c0_24] : memref<128x128xbf16, #tpu.memory_space<vmem>>, vector<128x128xbf16>
      tpu.vector_store %arg7[%c0_23, %c0_24], %34 {strides = array<i32>} : memref<128x128xbf16, #tpu.memory_space<vmem>>, vector<128x128xbf16>,
    } else {
    }
    return
  }
  func.func @transform_0(%arg0: i32, %arg1: i32) -> (i32, i32) {
    %c0_i32 = arith.constant 0 : i32
    return %arg0, %arg1 : i32, i32
  }
  func.func @transform_1(%arg0: i32, %arg1: i32) -> (i32, i32) {
    %c0_i32 = arith.constant 0 : i32
    %c0_i32_0 = arith.constant 0 : i32
    %c0_i32_1 = arith.constant 0 : i32
    return %c0_i32, %c0_i32_0 : i32, i32
  }
  func.func @transform_2(%arg0: i32, %arg1: i32) -> (i32, i32) {
    %c0_i32 = arith.constant 0 : i32
    %c0_i32_0 = arith.constant 0 : i32
    return %arg0, %c0_i32 : i32, i32
  }
  func.func @transform_3(%arg0: i32, %arg1: i32) -> (i32, i32) {
    %c0_i32 = arith.constant 0 : i32
    %c0_i32_0 = arith.constant 0 : i32
    %c0_i32_1 = arith.constant 0 : i32
    return %c0_i32, %c0_i32_0 : i32, i32
  }
  func.func @transform_4(%arg0: i32, %arg1: i32) -> (i32, i32) {
    %c0_i32 = arith.constant 0 : i32
    %c0_i32_0 = arith.constant 0 : i32
    %c0_i32_1 = arith.constant 0 : i32
    return %c0_i32, %c0_i32_0 : i32, i32
  }
  func.func @transform_5(%arg0: i32, %arg1: i32) -> (i32, i32) {
    %c0_i32 = arith.constant 0 : i32
    %c0_i32_0 = arith.constant 0 : i32
    return %arg0, %c0_i32 : i32, i32
  }
}

</mosaic_0001>

<llo_original>
// kernel: gnn_forward.2
$region0: #{gnn_forward.2}
  #allocation0 [shape = 'u32[]', space=smem, size = 0x4, offset = 0x4, fixed_abs, tag = 'smem constant byte address 0x4 - core index']
  #allocation1 [shape = 'u32[144,128]{1,0:T(1,128)}', space=vmem, size = 0x12000, scoped, tag = 'internal scratch']
  #allocation2 [shape = 'f32[128,128]{1,0:T(8,128)}', space=vmem, size = 0x10000, scoped, tag = 'scratch operand']
  %s0 = inlined_call_operand.vmem [shape: bf16[128,128], index: 0, kind: input, shape index: {}]
  %s1 = inlined_call_operand.vmem [shape: bf16[128,128], index: 1, kind: input, shape index: {}]
  %s2 = inlined_call_operand.vmem [shape: f32[128,1], index: 2, kind: input, shape index: {}]
  %s3 = inlined_call_operand.vmem [shape: bf16[256,128], index: 3, kind: input, shape index: {}]
  %s4 = inlined_call_operand.vmem [shape: f32[1,128], index: 4, kind: input, shape index: {}]
  %s5 = inlined_call_operand.vmem [shape: bf16[128,128], index: 5, kind: output, shape index: {}]
  %s6 = sld [smem:[#allocation0]]
  $region38: #{gnn_forward.2} parent=0
    _
  %s8 = ssub.s32 1, %s6
  %s9 = scalar_select 0, %s8, %s6
  // Predicated region
  $region2: #{gnn_forward.2} parent=0 // pred_check
    _
  $region3: #{gnn_forward.2} parent=0 // pred_check_branch
    %11 = sbr.rel (0) target = $region5
  $region4: #{gnn_forward.2} parent=0 // pred_region
    _
  $region5: #{gnn_forward.2} parent=0 // pred_fallthru
    _
  // Predicated region
  $region6: #{gnn_forward.2} parent=0 // pred_check
    _
  $region7: #{gnn_forward.2} parent=0 // pred_check_branch
    %13 = sbr.rel (0) target = $region9
  $region8: #{gnn_forward.2} parent=0 // pred_region
    _
  $region9: #{gnn_forward.2} parent=0 // pred_fallthru
    _
  // Predicated region
  $region10: #{gnn_forward.2} parent=0 // pred_check
    _
  $region11: #{gnn_forward.2} parent=0 // pred_check_branch
    %15 = sbr.rel (0) target = $region13
  $region12: #{gnn_forward.2} parent=0 // pred_region
    _
  $region13: #{gnn_forward.2} parent=0 // pred_fallthru
    _
  // Predicated region
  $region14: #{gnn_forward.2} parent=0 // pred_check
    _
  $region15: #{gnn_forward.2} parent=0 // pred_check_branch
    %17 = sbr.rel (0) target = $region17
  $region16: #{gnn_forward.2} parent=0 // pred_region
    _
  $region17: #{gnn_forward.2} parent=0 // pred_fallthru
    _
  // Predicated region
  $region18: #{gnn_forward.2} parent=0 // pred_check
    _
  $region19: #{gnn_forward.2} parent=0 // pred_check_branch
    %19 = sbr.rel (0) target = $region21
  $region20: #{gnn_forward.2} parent=0 // pred_region
    _
  $region21: #{gnn_forward.2} parent=0 // pred_fallthru
    _
  %p21 = scmp.eq.s32.totalorder 0, 0
  // Predicated region
  $region22: #{gnn_forward.2} parent=0 // pred_check
    %p22 = pneg %p21
  $region23: #{gnn_forward.2} parent=0 // pred_check_branch
    %24 = sbr.rel (%p22) target = $region25
  $region24: #{gnn_forward.2} parent=0 // pred_region
    %25 = vst [vmem:[#allocation2] sm:$0xff] 0.0
    %26 = vst [vmem:[#allocation2 + $0x8] sm:$0xff] 0.0
    %27 = vst [vmem:[#allocation2 + $0x10] sm:$0xff] 0.0
    %28 = vst [vmem:[#allocation2 + $0x18] sm:$0xff] 0.0
    %29 = vst [vmem:[#allocation2 + $0x20] sm:$0xff] 0.0
    %30 = vst [vmem:[#allocation2 + $0x28] sm:$0xff] 0.0
    %31 = vst [vmem:[#allocation2 + $0x30] sm:$0xff] 0.0
    %32 = vst [vmem:[#allocation2 + $0x38] sm:$0xff] 0.0
    %33 = vst [vmem:[#allocation2 + $0x40] sm:$0xff] 0.0
    %34 = vst [vmem:[#allocation2 + $0x48] sm:$0xff] 0.0
    %35 = vst [vmem:[#allocation2 + $0x50] sm:$0xff] 0.0
    %36 = vst [vmem:[#allocation2 + $0x58] sm:$0xff] 0.0
    %37 = vst [vmem:[#allocation2 + $0x60] sm:$0xff] 0.0
    %38 = vst [vmem:[#allocation2 + $0x68] sm:$0xff] 0.0
    %39 = vst [vmem:[#allocation2 + $0x70] sm:$0xff] 0.0
    %40 = vst [vmem:[#allocation2 + $0x78] sm:$0xff] 0.0
  $region25: #{gnn_forward.2} parent=0 // pred_fallthru
    _
  %s41 = smul.u32 0, 128
  %s42 = sshra.s32 %s41, 3
  %s43 = sand.u32 %s41, 7
  %s44 = smul.addr %s42, 4
  %s45 = scalar_lea.vmem %s1, %s44
  %v46 = vld [vmem:[%s45] sm:$0xf]
  %v47 = vld [vmem:[%s45 + $0x4] sm:$0xf]
  %v48 = vld [vmem:[%s45 + $0x8] sm:$0xf]
  %v49 = vld [vmem:[%s45 + $0xc] sm:$0xf]
  %v50 = vld [vmem:[%s45 + $0x10] sm:$0xf]
  %v51 = vld [vmem:[%s45 + $0x14] sm:$0xf]
  %v52 = vld [vmem:[%s45 + $0x18] sm:$0xf]
  %v53 = vld [vmem:[%s45 + $0x1c] sm:$0xf]
  %v54 = vld [vmem:[%s45 + $0x20] sm:$0xf]
  %v55 = vld [vmem:[%s45 + $0x24] sm:$0xf]
  %v56 = vld [vmem:[%s45 + $0x28] sm:$0xf]
  %v57 = vld [vmem:[%s45 + $0x2c] sm:$0xf]
  %v58 = vld [vmem:[%s45 + $0x30] sm:$0xf]
  %v59 = vld [vmem:[%s45 + $0x34] sm:$0xf]
  %v60 = vld [vmem:[%s45 + $0x38] sm:$0xf]
  %v61 = vld [vmem:[%s45 + $0x3c] sm:$0xf]
  %v62 = vld [vmem:[#allocation2] sm:$0xff]
  %v63 = vld [vmem:[#allocation2 + $0x8] sm:$0xff]
  %v64 = vld [vmem:[#allocation2 + $0x10] sm:$0xff]
  %v65 = vld [vmem:[#allocation2 + $0x18] sm:$0xff]
  %v66 = vld [vmem:[#allocation2 + $0x20] sm:$0xff]
  %v67 = vld [vmem:[#allocation2 + $0x28] sm:$0xff]
  %v68 = vld [vmem:[#allocation2 + $0x30] sm:$0xff]
  %v69 = vld [vmem:[#allocation2 + $0x38] sm:$0xff]
  %v70 = vld [vmem:[#allocation2 + $0x40] sm:$0xff]
  %v71 = vld [vmem:[#allocation2 + $0x48] sm:$0xff]
  %v72 = vld [vmem:[#allocation2 + $0x50] sm:$0xff]
  %v73 = vld [vmem:[#allocation2 + $0x58] sm:$0xff]
  %v74 = vld [vmem:[#allocation2 + $0x60] sm:$0xff]
  %v75 = vld [vmem:[#allocation2 + $0x68] sm:$0xff]
  %v76 = vld [vmem:[#allocation2 + $0x70] sm:$0xff]
  %v77 = vld [vmem:[#allocation2 + $0x78] sm:$0xff]
  %v78 = vld [vmem:[%s0] sm:$0xf]
  %v79 = vld [vmem:[%s0 + $0x4] sm:$0xf]
  %v80 = vld [vmem:[%s0 + $0x8] sm:$0xf]
  %v81 = vld [vmem:[%s0 + $0xc] sm:$0xf]
  %v82 = vld [vmem:[%s0 + $0x10] sm:$0xf]
  %v83 = vld [vmem:[%s0 + $0x14] sm:$0xf]
  %v84 = vld [vmem:[%s0 + $0x18] sm:$0xf]
  %v85 = vld [vmem:[%s0 + $0x1c] sm:$0xf]
  %v86 = vld [vmem:[%s0 + $0x20] sm:$0xf]
  %v87 = vld [vmem:[%s0 + $0x24] sm:$0xf]
  %v88 = vld [vmem:[%s0 + $0x28] sm:$0xf]
  %v89 = vld [vmem:[%s0 + $0x2c] sm:$0xf]
  %v90 = vld [vmem:[%s0 + $0x30] sm:$0xf]
  %v91 = vld [vmem:[%s0 + $0x34] sm:$0xf]
  %v92 = vld [vmem:[%s0 + $0x38] sm:$0xf]
  %v93 = vld [vmem:[%s0 + $0x3c] sm:$0xf]
  %v110 = vunpack.c.l.b16 %v78
  %v111 = vunpack.c.l.b16 %v79
  %v112 = vunpack.c.l.b16 %v80
  %v113 = vunpack.c.l.b16 %v81
  %v114 = vunpack.c.l.b16 %v82
  %v115 = vunpack.c.l.b16 %v83
  %v116 = vunpack.c.l.b16 %v84
  %v117 = vunpack.c.l.b16 %v85
  %v118 = vunpack.c.l.b16 %v86
  %v119 = vunpack.c.l.b16 %v87
  %v120 = vunpack.c.l.b16 %v88
  %v121 = vunpack.c.l.b16 %v89
  %v122 = vunpack.c.l.b16 %v90
  %v123 = vunpack.c.l.b16 %v91
  %v124 = vunpack.c.l.b16 %v92
  %v125 = vunpack.c.l.b16 %v93
  %v126 = vpack.c.b16 %v111, %v110
  %v127 = vpack.c.b16 %v113, %v112
  %v128 = vpack.c.b16 %v115, %v114
  %v129 = vpack.c.b16 %v117, %v116
  %v130 = vpack.c.b16 %v119, %v118
  %v131 = vpack.c.b16 %v121, %v120
  %v132 = vpack.c.b16 %v123, %v122
  %v133 = vpack.c.b16 %v125, %v124
  %v158 = vunpack.c.l.b16 %v46
  %v159 = vunpack.c.l.b16 %v47
  %v160 = vunpack.c.l.b16 %v48
  %v161 = vunpack.c.l.b16 %v49
  %v162 = vunpack.c.l.b16 %v50
  %v163 = vunpack.c.l.b16 %v51
  %v164 = vunpack.c.l.b16 %v52
  %v165 = vunpack.c.l.b16 %v53
  %v166 = vunpack.c.l.b16 %v54
  %v167 = vunpack.c.l.b16 %v55
  %v168 = vunpack.c.l.b16 %v56
  %v169 = vunpack.c.l.b16 %v57
  %v170 = vunpack.c.l.b16 %v58
  %v171 = vunpack.c.l.b16 %v59
  %v172 = vunpack.c.l.b16 %v60
  %v173 = vunpack.c.l.b16 %v61
  %v174 = vpack.c.b16 %v159, %v158
  %v175 = vpack.c.b16 %v161, %v160
  %v176 = vpack.c.b16 %v163, %v162
  %v177 = vpack.c.b16 %v165, %v164
  %v178 = vpack.c.b16 %v167, %v166
  %v179 = vpack.c.b16 %v169, %v168
  %v180 = vpack.c.b16 %v171, %v170
  %v181 = vpack.c.b16 %v173, %v172
  %190 = vmatprep.subr.bf16.mxu0 0
  %191 = vmatpush1.bf16.msra.mxu0 %v181
  %192 = vmatprep.subr.bf16.mxu0 0
  %193 = vmatpush1.bf16.msra.mxu0 %v180
  %194 = vmatprep.subr.bf16.mxu0 0
  %195 = vmatpush1.bf16.msra.mxu0 %v179
  %196 = vmatprep.subr.bf16.mxu0 0
  %197 = vmatpush1.bf16.msra.mxu0 %v178
  %198 = vmatprep.subr.bf16.mxu0 0
  %199 = vmatpush1.bf16.msra.mxu0 %v177
  %200 = vmatprep.subr.bf16.mxu0 0
  %201 = vmatpush1.bf16.msra.mxu0 %v176
  %202 = vmatprep.subr.bf16.mxu0 0
  %203 = vmatpush1.bf16.msra.mxu0 %v175
  %204 = vmatprep.subr.bf16.mxu0 0
  %205 = vmatpush1.bf16.msra.mxu0 %v174
  %206 = vmatprep.subr.bf16.mxu0 0
  %207 = vmatpush2.bf16.msra.mxu0 0
  %208 = vmatprep.subr.bf16.mxu0 0
  %209 = vmatpush2.bf16.msra.mxu0 0
  %210 = vmatprep.subr.bf16.mxu0 0
  %211 = vmatpush2.bf16.msra.mxu0 0
  %212 = vmatprep.subr.bf16.mxu0 0
  %213 = vmatpush2.bf16.msra.mxu0 0
  %214 = vmatprep.subr.bf16.mxu0 0
  %215 = vmatpush2.bf16.msra.mxu0 0
  %216 = vmatprep.subr.bf16.mxu0 0
  %217 = vmatpush2.bf16.msra.mxu0 0
  %218 = vmatprep.subr.bf16.mxu0 0
  %219 = vmatpush2.bf16.msra.mxu0 0
  %220 = vmatprep.subr.bf16.mxu0 0
  %221 = vmatpush2.bf16.msra.mxu0 0
  %222 = vmatprep.mubr.bf16.mxu0 0
  %223 = vmatmul.mubr.bf16.gmra.mxu0 %v126
  %v224 = vpop.f32.mrf.mxu0
  %v225 = vadd.f32 0.0, %v224
  %v226 = vpop.f32.mrf.mxu0
  %v227 = vpop.f32.mrf.mxu0
  %v228 = vadd.f32 0.0, %v227
  %v229 = vpop.f32.mrf.mxu0
  %230 = vmatprep.mubr.bf16.mxu0 0
  %231 = vmatmul.mubr.bf16.gmra.mxu0 %v127
  %v232 = vpop.f32.mrf.mxu0
  %v233 = vadd.f32 0.0, %v232
  %v234 = vpop.f32.mrf.mxu0
  %v235 = vpop.f32.mrf.mxu0
  %v236 = vadd.f32 0.0, %v235
  %v237 = vpop.f32.mrf.mxu0
  %238 = vmatprep.mubr.bf16.mxu0 0
  %239 = vmatmul.mubr.bf16.gmra.mxu0 %v128
  %v240 = vpop.f32.mrf.mxu0
  %v241 = vadd.f32 0.0, %v240
  %v242 = vpop.f32.mrf.mxu0
  %v243 = vpop.f32.mrf.mxu0
  %v244 = vadd.f32 0.0, %v243
  %v245 = vpop.f32.mrf.mxu0
  %246 = vmatprep.mubr.bf16.mxu0 0
  %247 = vmatmul.mubr.bf16.gmra.mxu0 %v129
  %v248 = vpop.f32.mrf.mxu0
  %v249 = vadd.f32 0.0, %v248
  %v250 = vpop.f32.mrf.mxu0
  %v251 = vpop.f32.mrf.mxu0
  %v252 = vadd.f32 0.0, %v251
  %v253 = vpop.f32.mrf.mxu0
  %254 = vmatprep.mubr.bf16.mxu0 0
  %255 = vmatmul.mubr.bf16.gmra.mxu0 %v130
  %v256 = vpop.f32.mrf.mxu0
  %v257 = vadd.f32 0.0, %v256
  %v258 = vpop.f32.mrf.mxu0
  %v259 = vpop.f32.mrf.mxu0
  %v260 = vadd.f32 0.0, %v259
  %v261 = vpop.f32.mrf.mxu0
  %262 = vmatprep.mubr.bf16.mxu0 0
  %263 = vmatmul.mubr.bf16.gmra.mxu0 %v131
  %v264 = vpop.f32.mrf.mxu0
  %v265 = vadd.f32 0.0, %v264
  %v266 = vpop.f32.mrf.mxu0
  %v267 = vpop.f32.mrf.mxu0
  %v268 = vadd.f32 0.0, %v267
  %v269 = vpop.f32.mrf.mxu0
  %270 = vmatprep.mubr.bf16.mxu0 0
  %271 = vmatmul.mubr.bf16.gmra.mxu0 %v132
  %v272 = vpop.f32.mrf.mxu0
  %v273 = vadd.f32 0.0, %v272
  %v274 = vpop.f32.mrf.mxu0
  %v275 = vpop.f32.mrf.mxu0
  %v276 = vadd.f32 0.0, %v275
  %v277 = vpop.f32.mrf.mxu0
  %278 = vmatprep.mubr.bf16.mxu0 0
  %279 = vmatmul.mubr.bf16.gmra.mxu0 %v133
  %v280 = vpop.f32.mrf.mxu0
  %v281 = vadd.f32 0.0, %v280
  %v282 = vpop.f32.mrf.mxu0
  %v283 = vpop.f32.mrf.mxu0
  %v284 = vadd.f32 0.0, %v283
  %v285 = vpop.f32.mrf.mxu0
  %286 = vdwg.mxu0
  %v287 = vadd.f32 %v62, %v225
  %v288 = vadd.f32 %v63, %v228
  %v289 = vadd.f32 %v64, %v233
  %v290 = vadd.f32 %v65, %v236
  %v291 = vadd.f32 %v66, %v241
  %v292 = vadd.f32 %v67, %v244
  %v293 = vadd.f32 %v68, %v249
  %v294 = vadd.f32 %v69, %v252
  %v295 = vadd.f32 %v70, %v257
  %v296 = vadd.f32 %v71, %v260
  %v297 = vadd.f32 %v72, %v265
  %v298 = vadd.f32 %v73, %v268
  %v299 = vadd.f32 %v74, %v273
  %v300 = vadd.f32 %v75, %v276
  %v301 = vadd.f32 %v76, %v281
  %v302 = vadd.f32 %v77, %v284
  %303 = vst [vmem:[#allocation2] sm:$0xff] %v287
  %304 = vst [vmem:[#allocation2 + $0x8] sm:$0xff] %v288
  %305 = vst [vmem:[#allocation2 + $0x10] sm:$0xff] %v289
  %306 = vst [vmem:[#allocation2 + $0x18] sm:$0xff] %v290
  %307 = vst [vmem:[#allocation2 + $0x20] sm:$0xff] %v291
  %308 = vst [vmem:[#allocation2 + $0x28] sm:$0xff] %v292
  %309 = vst [vmem:[#allocation2 + $0x30] sm:$0xff] %v293
  %310 = vst [vmem:[#allocation2 + $0x38] sm:$0xff] %v294
  %311 = vst [vmem:[#allocation2 + $0x40] sm:$0xff] %v295
  %312 = vst [vmem:[#allocation2 + $0x48] sm:$0xff] %v296
  %313 = vst [vmem:[#allocation2 + $0x50] sm:$0xff] %v297
  %314 = vst [vmem:[#allocation2 + $0x58] sm:$0xff] %v298
  %315 = vst [vmem:[#allocation2 + $0x60] sm:$0xff] %v299
  %316 = vst [vmem:[#allocation2 + $0x68] sm:$0xff] %v300
  %317 = vst [vmem:[#allocation2 + $0x70] sm:$0xff] %v301
  %318 = vst [vmem:[#allocation2 + $0x78] sm:$0xff] %v302
  // Predicated region
  $region26: #{gnn_forward.2} parent=0 // pred_check
    %p319 = pneg %p21
  $region27: #{gnn_forward.2} parent=0 // pred_check_branch
    %321 = sbr.rel (%p319) target = $region29
  $region28: #{gnn_forward.2} parent=0 // pred_region
    %v322 = vld [vmem:[#allocation2] sm:$0xff]
    %v323 = vld [vmem:[#allocation2 + $0x8] sm:$0xff]
    %v324 = vld [vmem:[#allocation2 + $0x10] sm:$0xff]
    %v325 = vld [vmem:[#allocation2 + $0x18] sm:$0xff]
    %v326 = vld [vmem:[#allocation2 + $0x20] sm:$0xff]
    %v327 = vld [vmem:[#allocation2 + $0x28] sm:$0xff]
    %v328 = vld [vmem:[#allocation2 + $0x30] sm:$0xff]
    %v329 = vld [vmem:[#allocation2 + $0x38] sm:$0xff]
    %v330 = vld [vmem:[#allocation2 + $0x40] sm:$0xff]
    %v331 = vld [vmem:[#allocation2 + $0x48] sm:$0xff]
    %v332 = vld [vmem:[#allocation2 + $0x50] sm:$0xff]
    %v333 = vld [vmem:[#allocation2 + $0x58] sm:$0xff]
    %v334 = vld [vmem:[#allocation2 + $0x60] sm:$0xff]
    %v335 = vld [vmem:[#allocation2 + $0x68] sm:$0xff]
    %v336 = vld [vmem:[#allocation2 + $0x70] sm:$0xff]
    %v337 = vld [vmem:[#allocation2 + $0x78] sm:$0xff]
    %v338 = vld [vmem:[%s2] sm:$0xff]
    %v339 = vld [vmem:[%s2 + $0x8] sm:$0xff]
    %v340 = vld [vmem:[%s2 + $0x10] sm:$0xff]
    %v341 = vld [vmem:[%s2 + $0x18] sm:$0xff]
    %v342 = vld [vmem:[%s2 + $0x20] sm:$0xff]
    %v343 = vld [vmem:[%s2 + $0x28] sm:$0xff]
    %v344 = vld [vmem:[%s2 + $0x30] sm:$0xff]
    %v345 = vld [vmem:[%s2 + $0x38] sm:$0xff]
    %v346 = vld [vmem:[%s2 + $0x40] sm:$0xff]
    %v347 = vld [vmem:[%s2 + $0x48] sm:$0xff]
    %v348 = vld [vmem:[%s2 + $0x50] sm:$0xff]
    %v349 = vld [vmem:[%s2 + $0x58] sm:$0xff]
    %v350 = vld [vmem:[%s2 + $0x60] sm:$0xff]
    %v351 = vld [vmem:[%s2 + $0x68] sm:$0xff]
    %v352 = vld [vmem:[%s2 + $0x70] sm:$0xff]
    %v353 = vld [vmem:[%s2 + $0x78] sm:$0xff]
    %355 = vset.pattern.permute.xlu0 0
    %356 = vperm.xlu0 %355, %v338
    %v357 = vpop.permute.xlu0 %356
    %360 = vset.pattern.permute.xlu0 0
    %361 = vperm.xlu0 %360, %v339
    %v362 = vpop.permute.xlu0 %361
    %365 = vset.pattern.permute.xlu0 0
    %366 = vperm.xlu0 %365, %v340
    %v367 = vpop.permute.xlu0 %366
    %370 = vset.pattern.permute.xlu0 0
    %371 = vperm.xlu0 %370, %v341
    %v372 = vpop.permute.xlu0 %371
    %375 = vset.pattern.permute.xlu0 0
    %376 = vperm.xlu0 %375, %v342
    %v377 = vpop.permute.xlu0 %376
    %380 = vset.pattern.permute.xlu0 0
    %381 = vperm.xlu0 %380, %v343
    %v382 = vpop.permute.xlu0 %381
    %385 = vset.pattern.permute.xlu0 0
    %386 = vperm.xlu0 %385, %v344
    %v387 = vpop.permute.xlu0 %386
    %390 = vset.pattern.permute.xlu0 0
    %391 = vperm.xlu0 %390, %v345
    %v392 = vpop.permute.xlu0 %391
    %395 = vset.pattern.permute.xlu0 0
    %396 = vperm.xlu0 %395, %v346
    %v397 = vpop.permute.xlu0 %396
    %400 = vset.pattern.permute.xlu0 0
    %401 = vperm.xlu0 %400, %v347
    %v402 = vpop.permute.xlu0 %401
    %405 = vset.pattern.permute.xlu0 0
    %406 = vperm.xlu0 %405, %v348
    %v407 = vpop.permute.xlu0 %406
    %410 = vset.pattern.permute.xlu0 0
    %411 = vperm.xlu0 %410, %v349
    %v412 = vpop.permute.xlu0 %411
    %415 = vset.pattern.permute.xlu0 0
    %416 = vperm.xlu0 %415, %v350
    %v417 = vpop.permute.xlu0 %416
    %420 = vset.pattern.permute.xlu0 0
    %421 = vperm.xlu0 %420, %v351
    %v422 = vpop.permute.xlu0 %421
    %425 = vset.pattern.permute.xlu0 0
    %426 = vperm.xlu0 %425, %v352
    %v427 = vpop.permute.xlu0 %426
    %430 = vset.pattern.permute.xlu0 0
    %431 = vperm.xlu0 %430, %v353
    %v432 = vpop.permute.xlu0 %431
    %v434 = vmul.f32 %v322, %v357
    %v435 = vmul.f32 %v323, %v362
    %v436 = vmul.f32 %v324, %v367
    %v437 = vmul.f32 %v325, %v372
    %v438 = vmul.f32 %v326, %v377
    %v439 = vmul.f32 %v327, %v382
    %v440 = vmul.f32 %v328, %v387
    %v441 = vmul.f32 %v329, %v392
    %v442 = vmul.f32 %v330, %v397
    %v443 = vmul.f32 %v331, %v402
    %v444 = vmul.f32 %v332, %v407
    %v445 = vmul.f32 %v333, %v412
    %v446 = vmul.f32 %v334, %v417
    %v447 = vmul.f32 %v335, %v422
    %v448 = vmul.f32 %v336, %v427
    %v449 = vmul.f32 %v337, %v432
    %v450 = vpack.c.bf16 %v435, %v434
    %v451 = vpack.c.bf16 %v437, %v436
    %v452 = vpack.c.bf16 %v439, %v438
    %v453 = vpack.c.bf16 %v441, %v440
    %v454 = vpack.c.bf16 %v443, %v442
    %v455 = vpack.c.bf16 %v445, %v444
    %v456 = vpack.c.bf16 %v447, %v446
    %v457 = vpack.c.bf16 %v449, %v448
    %s458 = smul.u32 0, 128
    %s459 = sshra.s32 %s458, 3
    %s460 = sand.u32 %s458, 7
    %s461 = smul.addr %s459, 4
    %s462 = scalar_lea.vmem %s1, %s461
    %v463 = vld [vmem:[%s462] sm:$0xf]
    %v464 = vld [vmem:[%s462 + $0x4] sm:$0xf]
    %v465 = vld [vmem:[%s462 + $0x8] sm:$0xf]
    %v466 = vld [vmem:[%s462 + $0xc] sm:$0xf]
    %v467 = vld [vmem:[%s462 + $0x10] sm:$0xf]
    %v468 = vld [vmem:[%s462 + $0x14] sm:$0xf]
    %v469 = vld [vmem:[%s462 + $0x18] sm:$0xf]
    %v470 = vld [vmem:[%s462 + $0x1c] sm:$0xf]
    %v471 = vld [vmem:[%s462 + $0x20] sm:$0xf]
    %v472 = vld [vmem:[%s462 + $0x24] sm:$0xf]
    %v473 = vld [vmem:[%s462 + $0x28] sm:$0xf]
    %v474 = vld [vmem:[%s462 + $0x2c] sm:$0xf]
    %v475 = vld [vmem:[%s462 + $0x30] sm:$0xf]
    %v476 = vld [vmem:[%s462 + $0x34] sm:$0xf]
    %v477 = vld [vmem:[%s462 + $0x38] sm:$0xf]
    %v478 = vld [vmem:[%s462 + $0x3c] sm:$0xf]
    %v479 = vld [vmem:[%s3] sm:$0xf]
    %v480 = vld [vmem:[%s3 + $0x4] sm:$0xf]
    %v481 = vld [vmem:[%s3 + $0x8] sm:$0xf]
    %v482 = vld [vmem:[%s3 + $0xc] sm:$0xf]
    %v483 = vld [vmem:[%s3 + $0x10] sm:$0xf]
    %v484 = vld [vmem:[%s3 + $0x14] sm:$0xf]
    %v485 = vld [vmem:[%s3 + $0x18] sm:$0xf]
    %v486 = vld [vmem:[%s3 + $0x1c] sm:$0xf]
    %v487 = vld [vmem:[%s3 + $0x20] sm:$0xf]
    %v488 = vld [vmem:[%s3 + $0x24] sm:$0xf]
    %v489 = vld [vmem:[%s3 + $0x28] sm:$0xf]
    %v490 = vld [vmem:[%s3 + $0x2c] sm:$0xf]
    %v491 = vld [vmem:[%s3 + $0x30] sm:$0xf]
    %v492 = vld [vmem:[%s3 + $0x34] sm:$0xf]
    %v493 = vld [vmem:[%s3 + $0x38] sm:$0xf]
    %v494 = vld [vmem:[%s3 + $0x3c] sm:$0xf]
    %v495 = vld [vmem:[%s3 + $0x40] sm:$0xf]
    %v496 = vld [vmem:[%s3 + $0x44] sm:$0xf]
    %v497 = vld [vmem:[%s3 + $0x48] sm:$0xf]
    %v498 = vld [vmem:[%s3 + $0x4c] sm:$0xf]
    %v499 = vld [vmem:[%s3 + $0x50] sm:$0xf]
    %v500 = vld [vmem:[%s3 + $0x54] sm:$0xf]
    %v501 = vld [vmem:[%s3 + $0x58] sm:$0xf]
    %v502 = vld [vmem:[%s3 + $0x5c] sm:$0xf]
    %v503 = vld [vmem:[%s3 + $0x60] sm:$0xf]
    %v504 = vld [vmem:[%s3 + $0x64] sm:$0xf]
    %v505 = vld [vmem:[%s3 + $0x68] sm:$0xf]
    %v506 = vld [vmem:[%s3 + $0x6c] sm:$0xf]
    %v507 = vld [vmem:[%s3 + $0x70] sm:$0xf]
    %v508 = vld [vmem:[%s3 + $0x74] sm:$0xf]
    %v509 = vld [vmem:[%s3 + $0x78] sm:$0xf]
    %v510 = vld [vmem:[%s3 + $0x7c] sm:$0xf]
    %v527 = vunpack.c.l.b16 %v463
    %v528 = vunpack.c.l.b16 %v464
    %v529 = vunpack.c.l.b16 %v465
    %v530 = vunpack.c.l.b16 %v466
    %v531 = vunpack.c.l.b16 %v467
    %v532 = vunpack.c.l.b16 %v468
    %v533 = vunpack.c.l.b16 %v469
    %v534 = vunpack.c.l.b16 %v470
    %v535 = vunpack.c.l.b16 %v471
    %v536 = vunpack.c.l.b16 %v472
    %v537 = vunpack.c.l.b16 %v473
    %v538 = vunpack.c.l.b16 %v474
    %v539 = vunpack.c.l.b16 %v475
    %v540 = vunpack.c.l.b16 %v476
    %v541 = vunpack.c.l.b16 %v477
    %v542 = vunpack.c.l.b16 %v478
    %v543 = vpack.c.b16 %v528, %v527
    %v544 = vpack.c.b16 %v530, %v529
    %v545 = vpack.c.b16 %v532, %v531
    %v546 = vpack.c.b16 %v534, %v533
    %v547 = vpack.c.b16 %v536, %v535
    %v548 = vpack.c.b16 %v538, %v537
    %v549 = vpack.c.b16 %v540, %v539
    %v550 = vpack.c.b16 %v542, %v541
    %v575 = vunpack.c.l.b16 %v495
    %v576 = vunpack.c.l.b16 %v496
    %v577 = vunpack.c.l.b16 %v497
    %v578 = vunpack.c.l.b16 %v498
    %v579 = vunpack.c.l.b16 %v499
    %v580 = vunpack.c.l.b16 %v500
    %v581 = vunpack.c.l.b16 %v501
    %v582 = vunpack.c.l.b16 %v502
    %v583 = vunpack.c.l.b16 %v503
    %v584 = vunpack.c.l.b16 %v504
    %v585 = vunpack.c.l.b16 %v505
    %v586 = vunpack.c.l.b16 %v506
    %v587 = vunpack.c.l.b16 %v507
    %v588 = vunpack.c.l.b16 %v508
    %v589 = vunpack.c.l.b16 %v509
    %v590 = vunpack.c.l.b16 %v510
    %v591 = vpack.c.b16 %v576, %v575
    %v592 = vpack.c.b16 %v578, %v577
    %v593 = vpack.c.b16 %v580, %v579
    %v594 = vpack.c.b16 %v582, %v581
    %v595 = vpack.c.b16 %v584, %v583
    %v596 = vpack.c.b16 %v586, %v585
    %v597 = vpack.c.b16 %v588, %v587
    %v598 = vpack.c.b16 %v590, %v589
    %607 = vmatprep.subr.bf16.mxu0 0
    %608 = vmatpush1.bf16.msra.mxu0 %v598
    %609 = vmatprep.subr.bf16.mxu0 0
    %610 = vmatpush1.bf16.msra.mxu0 %v597
    %611 = vmatprep.subr.bf16.mxu0 0
    %612 = vmatpush1.bf16.msra.mxu0 %v596
    %613 = vmatprep.subr.bf16.mxu0 0
    %614 = vmatpush1.bf16.msra.mxu0 %v595
    %615 = vmatprep.subr.bf16.mxu0 0
    %616 = vmatpush1.bf16.msra.mxu0 %v594
    %617 = vmatprep.subr.bf16.mxu0 0
    %618 = vmatpush1.bf16.msra.mxu0 %v593
    %619 = vmatprep.subr.bf16.mxu0 0
    %620 = vmatpush1.bf16.msra.mxu0 %v592
    %621 = vmatprep.subr.bf16.mxu0 0
    %622 = vmatpush1.bf16.msra.mxu0 %v591
    %623 = vmatprep.subr.bf16.mxu0 0
    %624 = vmatpush2.bf16.msra.mxu0 0
    %625 = vmatprep.subr.bf16.mxu0 0
    %626 = vmatpush2.bf16.msra.mxu0 0
    %627 = vmatprep.subr.bf16.mxu0 0
    %628 = vmatpush2.bf16.msra.mxu0 0
    %629 = vmatprep.subr.bf16.mxu0 0
    %630 = vmatpush2.bf16.msra.mxu0 0
    %631 = vmatprep.subr.bf16.mxu0 0
    %632 = vmatpush2.bf16.msra.mxu0 0
    %633 = vmatprep.subr.bf16.mxu0 0
    %634 = vmatpush2.bf16.msra.mxu0 0
    %635 = vmatprep.subr.bf16.mxu0 0
    %636 = vmatpush2.bf16.msra.mxu0 0
    %637 = vmatprep.subr.bf16.mxu0 0
    %638 = vmatpush2.bf16.msra.mxu0 0
    %639 = vmatprep.mubr.bf16.mxu0 0
    %640 = vmatmul.mubr.bf16.gmra.mxu0 %v543
    %v641 = vpop.f32.mrf.mxu0
    %v642 = vadd.f32 0.0, %v641
    %v643 = vpop.f32.mrf.mxu0
    %v644 = vpop.f32.mrf.mxu0
    %v645 = vadd.f32 0.0, %v644
    %v646 = vpop.f32.mrf.mxu0
    %647 = vmatprep.mubr.bf16.mxu0 0
    %648 = vmatmul.mubr.bf16.gmra.mxu0 %v544
    %v649 = vpop.f32.mrf.mxu0
    %v650 = vadd.f32 0.0, %v649
    %v651 = vpop.f32.mrf.mxu0
    %v652 = vpop.f32.mrf.mxu0
    %v653 = vadd.f32 0.0, %v652
    %v654 = vpop.f32.mrf.mxu0
    %655 = vmatprep.mubr.bf16.mxu0 0
    %656 = vmatmul.mubr.bf16.gmra.mxu0 %v545
    %v657 = vpop.f32.mrf.mxu0
    %v658 = vadd.f32 0.0, %v657
    %v659 = vpop.f32.mrf.mxu0
    %v660 = vpop.f32.mrf.mxu0
    %v661 = vadd.f32 0.0, %v660
    %v662 = vpop.f32.mrf.mxu0
    %663 = vmatprep.mubr.bf16.mxu0 0
    %664 = vmatmul.mubr.bf16.gmra.mxu0 %v546
    %v665 = vpop.f32.mrf.mxu0
    %v666 = vadd.f32 0.0, %v665
    %v667 = vpop.f32.mrf.mxu0
    %v668 = vpop.f32.mrf.mxu0
    %v669 = vadd.f32 0.0, %v668
    %v670 = vpop.f32.mrf.mxu0
    %671 = vmatprep.mubr.bf16.mxu0 0
    %672 = vmatmul.mubr.bf16.gmra.mxu0 %v547
    %v673 = vpop.f32.mrf.mxu0
    %v674 = vadd.f32 0.0, %v673
    %v675 = vpop.f32.mrf.mxu0
    %v676 = vpop.f32.mrf.mxu0
    %v677 = vadd.f32 0.0, %v676
    %v678 = vpop.f32.mrf.mxu0
    %679 = vmatprep.mubr.bf16.mxu0 0
    %680 = vmatmul.mubr.bf16.gmra.mxu0 %v548
    %v681 = vpop.f32.mrf.mxu0
    %v682 = vadd.f32 0.0, %v681
    %v683 = vpop.f32.mrf.mxu0
    %v684 = vpop.f32.mrf.mxu0
    %v685 = vadd.f32 0.0, %v684
    %v686 = vpop.f32.mrf.mxu0
    %687 = vmatprep.mubr.bf16.mxu0 0
    %688 = vmatmul.mubr.bf16.gmra.mxu0 %v549
    %v689 = vpop.f32.mrf.mxu0
    %v690 = vadd.f32 0.0, %v689
    %v691 = vpop.f32.mrf.mxu0
    %v692 = vpop.f32.mrf.mxu0
    %v693 = vadd.f32 0.0, %v692
    %v694 = vpop.f32.mrf.mxu0
    %695 = vmatprep.mubr.bf16.mxu0 0
    %696 = vmatmul.mubr.bf16.gmra.mxu0 %v550
    %v697 = vpop.f32.mrf.mxu0
    %v698 = vadd.f32 0.0, %v697
    %v699 = vpop.f32.mrf.mxu0
    %v700 = vpop.f32.mrf.mxu0
    %v701 = vadd.f32 0.0, %v700
    %v702 = vpop.f32.mrf.mxu0
    %703 = vdwg.mxu0
    %v720 = vunpack.c.l.b16 %v479
    %v721 = vunpack.c.l.b16 %v480
    %v722 = vunpack.c.l.b16 %v481
    %v723 = vunpack.c.l.b16 %v482
    %v724 = vunpack.c.l.b16 %v483
    %v725 = vunpack.c.l.b16 %v484
    %v726 = vunpack.c.l.b16 %v485
    %v727 = vunpack.c.l.b16 %v486
    %v728 = vunpack.c.l.b16 %v487
    %v729 = vunpack.c.l.b16 %v488
    %v730 = vunpack.c.l.b16 %v489
    %v731 = vunpack.c.l.b16 %v490
    %v732 = vunpack.c.l.b16 %v491
    %v733 = vunpack.c.l.b16 %v492
    %v734 = vunpack.c.l.b16 %v493
    %v735 = vunpack.c.l.b16 %v494
    %v736 = vpack.c.b16 %v721, %v720
    %v737 = vpack.c.b16 %v723, %v722
    %v738 = vpack.c.b16 %v725, %v724
    %v739 = vpack.c.b16 %v727, %v726
    %v740 = vpack.c.b16 %v729, %v728
    %v741 = vpack.c.b16 %v731, %v730
    %v742 = vpack.c.b16 %v733, %v732
    %v743 = vpack.c.b16 %v735, %v734
    %752 = vmatprep.subr.bf16.mxu0 0
    %753 = vmatpush1.bf16.msra.mxu0 %v743
    %754 = vmatprep.subr.bf16.mxu0 0
    %755 = vmatpush1.bf16.msra.mxu0 %v742
    %756 = vmatprep.subr.bf16.mxu0 0
    %757 = vmatpush1.bf16.msra.mxu0 %v741
    %758 = vmatprep.subr.bf16.mxu0 0
    %759 = vmatpush1.bf16.msra.mxu0 %v740
    %760 = vmatprep.subr.bf16.mxu0 0
    %761 = vmatpush1.bf16.msra.mxu0 %v739
    %762 = vmatprep.subr.bf16.mxu0 0
    %763 = vmatpush1.bf16.msra.mxu0 %v738
    %764 = vmatprep.subr.bf16.mxu0 0
    %765 = vmatpush1.bf16.msra.mxu0 %v737
    %766 = vmatprep.subr.bf16.mxu0 0
    %767 = vmatpush1.bf16.msra.mxu0 %v736
    %768 = vmatprep.subr.bf16.mxu0 0
    %769 = vmatpush2.bf16.msra.mxu0 0
    %770 = vmatprep.subr.bf16.mxu0 0
    %771 = vmatpush2.bf16.msra.mxu0 0
    %772 = vmatprep.subr.bf16.mxu0 0
    %773 = vmatpush2.bf16.msra.mxu0 0
    %774 = vmatprep.subr.bf16.mxu0 0
    %775 = vmatpush2.bf16.msra.mxu0 0
    %776 = vmatprep.subr.bf16.mxu0 0
    %777 = vmatpush2.bf16.msra.mxu0 0
    %778 = vmatprep.subr.bf16.mxu0 0
    %779 = vmatpush2.bf16.msra.mxu0 0
    %780 = vmatprep.subr.bf16.mxu0 0
    %781 = vmatpush2.bf16.msra.mxu0 0
    %782 = vmatprep.subr.bf16.mxu0 0
    %783 = vmatpush2.bf16.msra.mxu0 0
    %784 = vmatprep.mubr.bf16.mxu0 0
    %785 = vmatmul.mubr.bf16.gmra.mxu0 %v450
    %v786 = vpop.f32.mrf.mxu0
    %v787 = vadd.f32 %v642, %v786
    %v788 = vpop.f32.mrf.mxu0
    %v789 = vpop.f32.mrf.mxu0
    %v790 = vadd.f32 %v645, %v789
    %v791 = vpop.f32.mrf.mxu0
    %792 = vmatprep.mubr.bf16.mxu0 0
    %793 = vmatmul.mubr.bf16.gmra.mxu0 %v451
    %v794 = vpop.f32.mrf.mxu0
    %v795 = vadd.f32 %v650, %v794
    %v796 = vpop.f32.mrf.mxu0
    %v797 = vpop.f32.mrf.mxu0
    %v798 = vadd.f32 %v653, %v797
    %v799 = vpop.f32.mrf.mxu0
    %800 = vmatprep.mubr.bf16.mxu0 0
    %801 = vmatmul.mubr.bf16.gmra.mxu0 %v452
    %v802 = vpop.f32.mrf.mxu0
    %v803 = vadd.f32 %v658, %v802
    %v804 = vpop.f32.mrf.mxu0
    %v805 = vpop.f32.mrf.mxu0
    %v806 = vadd.f32 %v661, %v805
    %v807 = vpop.f32.mrf.mxu0
    %808 = vmatprep.mubr.bf16.mxu0 0
    %809 = vmatmul.mubr.bf16.gmra.mxu0 %v453
    %v810 = vpop.f32.mrf.mxu0
    %v811 = vadd.f32 %v666, %v810
    %v812 = vpop.f32.mrf.mxu0
    %v813 = vpop.f32.mrf.mxu0
    %v814 = vadd.f32 %v669, %v813
    %v815 = vpop.f32.mrf.mxu0
    %816 = vmatprep.mubr.bf16.mxu0 0
    %817 = vmatmul.mubr.bf16.gmra.mxu0 %v454
    %v818 = vpop.f32.mrf.mxu0
    %v819 = vadd.f32 %v674, %v818
    %v820 = vpop.f32.mrf.mxu0
    %v821 = vpop.f32.mrf.mxu0
    %v822 = vadd.f32 %v677, %v821
    %v823 = vpop.f32.mrf.mxu0
    %824 = vmatprep.mubr.bf16.mxu0 0
    %825 = vmatmul.mubr.bf16.gmra.mxu0 %v455
    %v826 = vpop.f32.mrf.mxu0
    %v827 = vadd.f32 %v682, %v826
    %v828 = vpop.f32.mrf.mxu0
    %v829 = vpop.f32.mrf.mxu0
    %v830 = vadd.f32 %v685, %v829
    %v831 = vpop.f32.mrf.mxu0
    %832 = vmatprep.mubr.bf16.mxu0 0
    %833 = vmatmul.mubr.bf16.gmra.mxu0 %v456
    %v834 = vpop.f32.mrf.mxu0
    %v835 = vadd.f32 %v690, %v834
    %v836 = vpop.f32.mrf.mxu0
    %v837 = vpop.f32.mrf.mxu0
    %v838 = vadd.f32 %v693, %v837
    %v839 = vpop.f32.mrf.mxu0
    %840 = vmatprep.mubr.bf16.mxu0 0
    %841 = vmatmul.mubr.bf16.gmra.mxu0 %v457
    %v842 = vpop.f32.mrf.mxu0
    %v843 = vadd.f32 %v698, %v842
    %v844 = vpop.f32.mrf.mxu0
    %v845 = vpop.f32.mrf.mxu0
    %v846 = vadd.f32 %v701, %v845
    %v847 = vpop.f32.mrf.mxu0
    %848 = vdwg.mxu0
    %v849 = vld [vmem:[%s4] sm:$0x1]
    %v851 = vlaneseq
    %v852 = vshrl.u32 %v851, 7
    %v853 = vsub.s32 0, %v852
    %v854 = vrot.slane %v849, %v853
    %v856 = vadd.f32 %v787, %v854
    %v857 = vadd.f32 %v790, %v854
    %v858 = vadd.f32 %v795, %v854
    %v859 = vadd.f32 %v798, %v854
    %v860 = vadd.f32 %v803, %v854
    %v861 = vadd.f32 %v806, %v854
    %v862 = vadd.f32 %v811, %v854
    %v863 = vadd.f32 %v814, %v854
    %v864 = vadd.f32 %v819, %v854
    %v865 = vadd.f32 %v822, %v854
    %v866 = vadd.f32 %v827, %v854
    %v867 = vadd.f32 %v830, %v854
    %v868 = vadd.f32 %v835, %v854
    %v869 = vadd.f32 %v838, %v854
    %v870 = vadd.f32 %v843, %v854
    %v871 = vadd.f32 %v846, %v854
    %v872 = vmax.f32 %v856, 0.0
    %v873 = vmax.f32 %v857, 0.0
    %v874 = vmax.f32 %v858, 0.0
    %v875 = vmax.f32 %v859, 0.0
    %v876 = vmax.f32 %v860, 0.0
    %v877 = vmax.f32 %v861, 0.0
    %v878 = vmax.f32 %v862, 0.0
    %v879 = vmax.f32 %v863, 0.0
    %v880 = vmax.f32 %v864, 0.0
    %v881 = vmax.f32 %v865, 0.0
    %v882 = vmax.f32 %v866, 0.0
    %v883 = vmax.f32 %v867, 0.0
    %v884 = vmax.f32 %v868, 0.0
    %v885 = vmax.f32 %v869, 0.0
    %v886 = vmax.f32 %v870, 0.0
    %v887 = vmax.f32 %v871, 0.0
    %v888 = vpack.c.bf16 %v873, %v872
    %v889 = vpack.c.bf16 %v875, %v874
    %v890 = vpack.c.bf16 %v877, %v876
    %v891 = vpack.c.bf16 %v879, %v878
    %v892 = vpack.c.bf16 %v881, %v880
    %v893 = vpack.c.bf16 %v883, %v882
    %v894 = vpack.c.bf16 %v885, %v884
    %v895 = vpack.c.bf16 %v887, %v886
    %v904 = vunpack.c.l.b16 %v888
    %v905 = vunpack.c.h.b16 %v888
    %v906 = vunpack.c.l.b16 %v889
    %v907 = vunpack.c.h.b16 %v889
    %v908 = vunpack.c.l.b16 %v890
    %v909 = vunpack.c.h.b16 %v890
    %v910 = vunpack.c.l.b16 %v891
    %v911 = vunpack.c.h.b16 %v891
    %v912 = vunpack.c.l.b16 %v892
    %v913 = vunpack.c.h.b16 %v892
    %v914 = vunpack.c.l.b16 %v893
    %v915 = vunpack.c.h.b16 %v893
    %v916 = vunpack.c.l.b16 %v894
    %v917 = vunpack.c.h.b16 %v894
    %v918 = vunpack.c.l.b16 %v895
    %v919 = vunpack.c.h.b16 %v895
    %v920 = vpack.c.b16 %v904, %v904
    %v921 = vpack.c.b16 %v905, %v905
    %v922 = vpack.c.b16 %v906, %v906
    %v923 = vpack.c.b16 %v907, %v907
    %v924 = vpack.c.b16 %v908, %v908
    %v925 = vpack.c.b16 %v909, %v909
    %v926 = vpack.c.b16 %v910, %v910
    %v927 = vpack.c.b16 %v911, %v911
    %v928 = vpack.c.b16 %v912, %v912
    %v929 = vpack.c.b16 %v913, %v913
    %v930 = vpack.c.b16 %v914, %v914
    %v931 = vpack.c.b16 %v915, %v915
    %v932 = vpack.c.b16 %v916, %v916
    %v933 = vpack.c.b16 %v917, %v917
    %v934 = vpack.c.b16 %v918, %v918
    %v935 = vpack.c.b16 %v919, %v919
    %952 = vst [vmem:[%s5] sm:$0xf] %v920
    %953 = vst [vmem:[%s5 + $0x4] sm:$0xf] %v921
    %954 = vst [vmem:[%s5 + $0x8] sm:$0xf] %v922
    %955 = vst [vmem:[%s5 + $0xc] sm:$0xf] %v923
    %956 = vst [vmem:[%s5 + $0x10] sm:$0xf] %v924
    %957 = vst [vmem:[%s5 + $0x14] sm:$0xf] %v925
    %958 = vst [vmem:[%s5 + $0x18] sm:$0xf] %v926
    %959 = vst [vmem:[%s5 + $0x1c] sm:$0xf] %v927
    %960 = vst [vmem:[%s5 + $0x20] sm:$0xf] %v928
    %961 = vst [vmem:[%s5 + $0x24] sm:$0xf] %v929
    %962 = vst [vmem:[%s5 + $0x28] sm:$0xf] %v930
    %963 = vst [vmem:[%s5 + $0x2c] sm:$0xf] %v931
    %964 = vst [vmem:[%s5 + $0x30] sm:$0xf] %v932
    %965 = vst [vmem:[%s5 + $0x34] sm:$0xf] %v933
    %966 = vst [vmem:[%s5 + $0x38] sm:$0xf] %v934
    %967 = vst [vmem:[%s5 + $0x3c] sm:$0xf] %v935
  $region29: #{gnn_forward.2} parent=0 // pred_fallthru
    _
  // Predicated region
  $region30: #{gnn_forward.2} parent=0 // pred_check
    _
  $region31: #{gnn_forward.2} parent=0 // pred_check_branch
    %969 = sbr.rel (0) target = $region33
  $region32: #{gnn_forward.2} parent=0 // pred_region
    _
  $region33: #{gnn_forward.2} parent=0 // pred_fallthru
    _
  // Predicated region
  $region34: #{gnn_forward.2} parent=0 // pred_check
    _
  $region35: #{gnn_forward.2} parent=0 // pred_check_branch
    %971 = sbr.rel (0) target = $region37
  $region36: #{gnn_forward.2} parent=0 // pred_region
    _
  $region37: #{gnn_forward.2} parent=0 // pred_fallthru
    _

// kernel: gnn_forward.3
$region0: #{gnn_forward.3}
  #allocation0 [shape = 'u32[]', space=smem, size = 0x4, offset = 0x4, fixed_abs, tag = 'smem constant byte address 0x4 - core index']
  #allocation1 [shape = 'u32[144,128]{1,0:T(1,128)}', space=vmem, size = 0x12000, scoped, tag = 'internal scratch']
  #allocation2 [shape = 'f32[128,128]{1,0:T(8,128)}', space=vmem, size = 0x10000, scoped, tag = 'scratch operand']
  %s0 = inlined_call_operand.vmem [shape: bf16[128,128], index: 0, kind: input, shape index: {}]
  %s1 = inlined_call_operand.vmem [shape: bf16[128,128], index: 1, kind: input, shape index: {}]
  %s2 = inlined_call_operand.vmem [shape: f32[128,1], index: 2, kind: input, shape index: {}]
  %s3 = inlined_call_operand.vmem [shape: bf16[256,128], index: 3, kind: input, shape index: {}]
  %s4 = inlined_call_operand.vmem [shape: f32[1,128], index: 4, kind: input, shape index: {}]
  %s5 = inlined_call_operand.vmem [shape: f32[128,128], index: 5, kind: output, shape index: {}]
  %s6 = sld [smem:[#allocation0]]
  $region38: #{gnn_forward.3} parent=0
    _
  %s8 = ssub.s32 1, %s6
  %s9 = scalar_select 0, %s8, %s6
  // Predicated region
  $region2: #{gnn_forward.3} parent=0 // pred_check
    _
  $region3: #{gnn_forward.3} parent=0 // pred_check_branch
    %11 = sbr.rel (0) target = $region5
  $region4: #{gnn_forward.3} parent=0 // pred_region
    _
  $region5: #{gnn_forward.3} parent=0 // pred_fallthru
    _
  // Predicated region
  $region6: #{gnn_forward.3} parent=0 // pred_check
    _
  $region7: #{gnn_forward.3} parent=0 // pred_check_branch
    %13 = sbr.rel (0) target = $region9
  $region8: #{gnn_forward.3} parent=0 // pred_region
    _
  $region9: #{gnn_forward.3} parent=0 // pred_fallthru
    _
  // Predicated region
  $region10: #{gnn_forward.3} parent=0 // pred_check
    _
  $region11: #{gnn_forward.3} parent=0 // pred_check_branch
    %15 = sbr.rel (0) target = $region13
  $region12: #{gnn_forward.3} parent=0 // pred_region
    _
  $region13: #{gnn_forward.3} parent=0 // pred_fallthru
    _
  // Predicated region
  $region14: #{gnn_forward.3} parent=0 // pred_check
    _
  $region15: #{gnn_forward.3} parent=0 // pred_check_branch
    %17 = sbr.rel (0) target = $region17
  $region16: #{gnn_forward.3} parent=0 // pred_region
    _
  $region17: #{gnn_forward.3} parent=0 // pred_fallthru
    _
  // Predicated region
  $region18: #{gnn_forward.3} parent=0 // pred_check
    _
  $region19: #{gnn_forward.3} parent=0 // pred_check_branch
    %19 = sbr.rel (0) target = $region21
  $region20: #{gnn_forward.3} parent=0 // pred_region
    _
  $region21: #{gnn_forward.3} parent=0 // pred_fallthru
    _
  %p21 = scmp.eq.s32.totalorder 0, 0
  // Predicated region
  $region22: #{gnn_forward.3} parent=0 // pred_check
    %p22 = pneg %p21
  $region23: #{gnn_forward.3} parent=0 // pred_check_branch
    %24 = sbr.rel (%p22) target = $region25
  $region24: #{gnn_forward.3} parent=0 // pred_region
    %25 = vst [vmem:[#allocation2] sm:$0xff] 0.0
    %26 = vst [vmem:[#allocation2 + $0x8] sm:$0xff] 0.0
    %27 = vst [vmem:[#allocation2 + $0x10] sm:$0xff] 0.0
    %28 = vst [vmem:[#allocation2 + $0x18] sm:$0xff] 0.0
    %29 = vst [vmem:[#allocation2 + $0x20] sm:$0xff] 0.0
    %30 = vst [vmem:[#allocation2 + $0x28] sm:$0xff] 0.0
    %31 = vst [vmem:[#allocation2 + $0x30] sm:$0xff] 0.0
    %32 = vst [vmem:[#allocation2 + $0x38] sm:$0xff] 0.0
    %33 = vst [vmem:[#allocation2 + $0x40] sm:$0xff] 0.0
    %34 = vst [vmem:[#allocation2 + $0x48] sm:$0xff] 0.0
    %35 = vst [vmem:[#allocation2 + $0x50] sm:$0xff] 0.0
    %36 = vst [vmem:[#allocation2 + $0x58] sm:$0xff] 0.0
    %37 = vst [vmem:[#allocation2 + $0x60] sm:$0xff] 0.0
    %38 = vst [vmem:[#allocation2 + $0x68] sm:$0xff] 0.0
    %39 = vst [vmem:[#allocation2 + $0x70] sm:$0xff] 0.0
    %40 = vst [vmem:[#allocation2 + $0x78] sm:$0xff] 0.0
  $region25: #{gnn_forward.3} parent=0 // pred_fallthru
    _
  %s41 = smul.u32 0, 128
  %s42 = sshra.s32 %s41, 3
  %s43 = sand.u32 %s41, 7
  %s44 = smul.addr %s42, 4
  %s45 = scalar_lea.vmem %s1, %s44
  %v46 = vld [vmem:[%s45] sm:$0xf]
  %v47 = vld [vmem:[%s45 + $0x4] sm:$0xf]
  %v48 = vld [vmem:[%s45 + $0x8] sm:$0xf]
  %v49 = vld [vmem:[%s45 + $0xc] sm:$0xf]
  %v50 = vld [vmem:[%s45 + $0x10] sm:$0xf]
  %v51 = vld [vmem:[%s45 + $0x14] sm:$0xf]
  %v52 = vld [vmem:[%s45 + $0x18] sm:$0xf]
  %v53 = vld [vmem:[%s45 + $0x1c] sm:$0xf]
  %v54 = vld [vmem:[%s45 + $0x20] sm:$0xf]
  %v55 = vld [vmem:[%s45 + $0x24] sm:$0xf]
  %v56 = vld [vmem:[%s45 + $0x28] sm:$0xf]
  %v57 = vld [vmem:[%s45 + $0x2c] sm:$0xf]
  %v58 = vld [vmem:[%s45 + $0x30] sm:$0xf]
  %v59 = vld [vmem:[%s45 + $0x34] sm:$0xf]
  %v60 = vld [vmem:[%s45 + $0x38] sm:$0xf]
  %v61 = vld [vmem:[%s45 + $0x3c] sm:$0xf]
  %v62 = vld [vmem:[#allocation2] sm:$0xff]
  %v63 = vld [vmem:[#allocation2 + $0x8] sm:$0xff]
  %v64 = vld [vmem:[#allocation2 + $0x10] sm:$0xff]
  %v65 = vld [vmem:[#allocation2 + $0x18] sm:$0xff]
  %v66 = vld [vmem:[#allocation2 + $0x20] sm:$0xff]
  %v67 = vld [vmem:[#allocation2 + $0x28] sm:$0xff]
  %v68 = vld [vmem:[#allocation2 + $0x30] sm:$0xff]
  %v69 = vld [vmem:[#allocation2 + $0x38] sm:$0xff]
  %v70 = vld [vmem:[#allocation2 + $0x40] sm:$0xff]
  %v71 = vld [vmem:[#allocation2 + $0x48] sm:$0xff]
  %v72 = vld [vmem:[#allocation2 + $0x50] sm:$0xff]
  %v73 = vld [vmem:[#allocation2 + $0x58] sm:$0xff]
  %v74 = vld [vmem:[#allocation2 + $0x60] sm:$0xff]
  %v75 = vld [vmem:[#allocation2 + $0x68] sm:$0xff]
  %v76 = vld [vmem:[#allocation2 + $0x70] sm:$0xff]
  %v77 = vld [vmem:[#allocation2 + $0x78] sm:$0xff]
  %v78 = vld [vmem:[%s0] sm:$0xf]
  %v79 = vld [vmem:[%s0 + $0x4] sm:$0xf]
  %v80 = vld [vmem:[%s0 + $0x8] sm:$0xf]
  %v81 = vld [vmem:[%s0 + $0xc] sm:$0xf]
  %v82 = vld [vmem:[%s0 + $0x10] sm:$0xf]
  %v83 = vld [vmem:[%s0 + $0x14] sm:$0xf]
  %v84 = vld [vmem:[%s0 + $0x18] sm:$0xf]
  %v85 = vld [vmem:[%s0 + $0x1c] sm:$0xf]
  %v86 = vld [vmem:[%s0 + $0x20] sm:$0xf]
  %v87 = vld [vmem:[%s0 + $0x24] sm:$0xf]
  %v88 = vld [vmem:[%s0 + $0x28] sm:$0xf]
  %v89 = vld [vmem:[%s0 + $0x2c] sm:$0xf]
  %v90 = vld [vmem:[%s0 + $0x30] sm:$0xf]
  %v91 = vld [vmem:[%s0 + $0x34] sm:$0xf]
  %v92 = vld [vmem:[%s0 + $0x38] sm:$0xf]
  %v93 = vld [vmem:[%s0 + $0x3c] sm:$0xf]
  %v110 = vunpack.c.l.b16 %v78
  %v111 = vunpack.c.l.b16 %v79
  %v112 = vunpack.c.l.b16 %v80
  %v113 = vunpack.c.l.b16 %v81
  %v114 = vunpack.c.l.b16 %v82
  %v115 = vunpack.c.l.b16 %v83
  %v116 = vunpack.c.l.b16 %v84
  %v117 = vunpack.c.l.b16 %v85
  %v118 = vunpack.c.l.b16 %v86
  %v119 = vunpack.c.l.b16 %v87
  %v120 = vunpack.c.l.b16 %v88
  %v121 = vunpack.c.l.b16 %v89
  %v122 = vunpack.c.l.b16 %v90
  %v123 = vunpack.c.l.b16 %v91
  %v124 = vunpack.c.l.b16 %v92
  %v125 = vunpack.c.l.b16 %v93
  %v126 = vpack.c.b16 %v111, %v110
  %v127 = vpack.c.b16 %v113, %v112
  %v128 = vpack.c.b16 %v115, %v114
  %v129 = vpack.c.b16 %v117, %v116
  %v130 = vpack.c.b16 %v119, %v118
  %v131 = vpack.c.b16 %v121, %v120
  %v132 = vpack.c.b16 %v123, %v122
  %v133 = vpack.c.b16 %v125, %v124
  %v158 = vunpack.c.l.b16 %v46
  %v159 = vunpack.c.l.b16 %v47
  %v160 = vunpack.c.l.b16 %v48
  %v161 = vunpack.c.l.b16 %v49
  %v162 = vunpack.c.l.b16 %v50
  %v163 = vunpack.c.l.b16 %v51
  %v164 = vunpack.c.l.b16 %v52
  %v165 = vunpack.c.l.b16 %v53
  %v166 = vunpack.c.l.b16 %v54
  %v167 = vunpack.c.l.b16 %v55
  %v168 = vunpack.c.l.b16 %v56
  %v169 = vunpack.c.l.b16 %v57
  %v170 = vunpack.c.l.b16 %v58
  %v171 = vunpack.c.l.b16 %v59
  %v172 = vunpack.c.l.b16 %v60
  %v173 = vunpack.c.l.b16 %v61
  %v174 = vpack.c.b16 %v159, %v158
  %v175 = vpack.c.b16 %v161, %v160
  %v176 = vpack.c.b16 %v163, %v162
  %v177 = vpack.c.b16 %v165, %v164
  %v178 = vpack.c.b16 %v167, %v166
  %v179 = vpack.c.b16 %v169, %v168
  %v180 = vpack.c.b16 %v171, %v170
  %v181 = vpack.c.b16 %v173, %v172
  %190 = vmatprep.subr.bf16.mxu0 0
  %191 = vmatpush1.bf16.msra.mxu0 %v181
  %192 = vmatprep.subr.bf16.mxu0 0
  %193 = vmatpush1.bf16.msra.mxu0 %v180
  %194 = vmatprep.subr.bf16.mxu0 0
  %195 = vmatpush1.bf16.msra.mxu0 %v179
  %196 = vmatprep.subr.bf16.mxu0 0
  %197 = vmatpush1.bf16.msra.mxu0 %v178
  %198 = vmatprep.subr.bf16.mxu0 0
  %199 = vmatpush1.bf16.msra.mxu0 %v177
  %200 = vmatprep.subr.bf16.mxu0 0
  %201 = vmatpush1.bf16.msra.mxu0 %v176
  %202 = vmatprep.subr.bf16.mxu0 0
  %203 = vmatpush1.bf16.msra.mxu0 %v175
  %204 = vmatprep.subr.bf16.mxu0 0
  %205 = vmatpush1.bf16.msra.mxu0 %v174
  %206 = vmatprep.subr.bf16.mxu0 0
  %207 = vmatpush2.bf16.msra.mxu0 0
  %208 = vmatprep.subr.bf16.mxu0 0
  %209 = vmatpush2.bf16.msra.mxu0 0
  %210 = vmatprep.subr.bf16.mxu0 0
  %211 = vmatpush2.bf16.msra.mxu0 0
  %212 = vmatprep.subr.bf16.mxu0 0
  %213 = vmatpush2.bf16.msra.mxu0 0
  %214 = vmatprep.subr.bf16.mxu0 0
  %215 = vmatpush2.bf16.msra.mxu0 0
  %216 = vmatprep.subr.bf16.mxu0 0
  %217 = vmatpush2.bf16.msra.mxu0 0
  %218 = vmatprep.subr.bf16.mxu0 0
  %219 = vmatpush2.bf16.msra.mxu0 0
  %220 = vmatprep.subr.bf16.mxu0 0
  %221 = vmatpush2.bf16.msra.mxu0 0
  %222 = vmatprep.mubr.bf16.mxu0 0
  %223 = vmatmul.mubr.bf16.gmra.mxu0 %v126
  %v224 = vpop.f32.mrf.mxu0
  %v225 = vadd.f32 0.0, %v224
  %v226 = vpop.f32.mrf.mxu0
  %v227 = vpop.f32.mrf.mxu0
  %v228 = vadd.f32 0.0, %v227
  %v229 = vpop.f32.mrf.mxu0
  %230 = vmatprep.mubr.bf16.mxu0 0
  %231 = vmatmul.mubr.bf16.gmra.mxu0 %v127
  %v232 = vpop.f32.mrf.mxu0
  %v233 = vadd.f32 0.0, %v232
  %v234 = vpop.f32.mrf.mxu0
  %v235 = vpop.f32.mrf.mxu0
  %v236 = vadd.f32 0.0, %v235
  %v237 = vpop.f32.mrf.mxu0
  %238 = vmatprep.mubr.bf16.mxu0 0
  %239 = vmatmul.mubr.bf16.gmra.mxu0 %v128
  %v240 = vpop.f32.mrf.mxu0
  %v241 = vadd.f32 0.0, %v240
  %v242 = vpop.f32.mrf.mxu0
  %v243 = vpop.f32.mrf.mxu0
  %v244 = vadd.f32 0.0, %v243
  %v245 = vpop.f32.mrf.mxu0
  %246 = vmatprep.mubr.bf16.mxu0 0
  %247 = vmatmul.mubr.bf16.gmra.mxu0 %v129
  %v248 = vpop.f32.mrf.mxu0
  %v249 = vadd.f32 0.0, %v248
  %v250 = vpop.f32.mrf.mxu0
  %v251 = vpop.f32.mrf.mxu0
  %v252 = vadd.f32 0.0, %v251
  %v253 = vpop.f32.mrf.mxu0
  %254 = vmatprep.mubr.bf16.mxu0 0
  %255 = vmatmul.mubr.bf16.gmra.mxu0 %v130
  %v256 = vpop.f32.mrf.mxu0
  %v257 = vadd.f32 0.0, %v256
  %v258 = vpop.f32.mrf.mxu0
  %v259 = vpop.f32.mrf.mxu0
  %v260 = vadd.f32 0.0, %v259
  %v261 = vpop.f32.mrf.mxu0
  %262 = vmatprep.mubr.bf16.mxu0 0
  %263 = vmatmul.mubr.bf16.gmra.mxu0 %v131
  %v264 = vpop.f32.mrf.mxu0
  %v265 = vadd.f32 0.0, %v264
  %v266 = vpop.f32.mrf.mxu0
  %v267 = vpop.f32.mrf.mxu0
  %v268 = vadd.f32 0.0, %v267
  %v269 = vpop.f32.mrf.mxu0
  %270 = vmatprep.mubr.bf16.mxu0 0
  %271 = vmatmul.mubr.bf16.gmra.mxu0 %v132
  %v272 = vpop.f32.mrf.mxu0
  %v273 = vadd.f32 0.0, %v272
  %v274 = vpop.f32.mrf.mxu0
  %v275 = vpop.f32.mrf.mxu0
  %v276 = vadd.f32 0.0, %v275
  %v277 = vpop.f32.mrf.mxu0
  %278 = vmatprep.mubr.bf16.mxu0 0
  %279 = vmatmul.mubr.bf16.gmra.mxu0 %v133
  %v280 = vpop.f32.mrf.mxu0
  %v281 = vadd.f32 0.0, %v280
  %v282 = vpop.f32.mrf.mxu0
  %v283 = vpop.f32.mrf.mxu0
  %v284 = vadd.f32 0.0, %v283
  %v285 = vpop.f32.mrf.mxu0
  %286 = vdwg.mxu0
  %v287 = vadd.f32 %v62, %v225
  %v288 = vadd.f32 %v63, %v228
  %v289 = vadd.f32 %v64, %v233
  %v290 = vadd.f32 %v65, %v236
  %v291 = vadd.f32 %v66, %v241
  %v292 = vadd.f32 %v67, %v244
  %v293 = vadd.f32 %v68, %v249
  %v294 = vadd.f32 %v69, %v252
  %v295 = vadd.f32 %v70, %v257
  %v296 = vadd.f32 %v71, %v260
  %v297 = vadd.f32 %v72, %v265
  %v298 = vadd.f32 %v73, %v268
  %v299 = vadd.f32 %v74, %v273
  %v300 = vadd.f32 %v75, %v276
  %v301 = vadd.f32 %v76, %v281
  %v302 = vadd.f32 %v77, %v284
  %303 = vst [vmem:[#allocation2] sm:$0xff] %v287
  %304 = vst [vmem:[#allocation2 + $0x8] sm:$0xff] %v288
  %305 = vst [vmem:[#allocation2 + $0x10] sm:$0xff] %v289
  %306 = vst [vmem:[#allocation2 + $0x18] sm:$0xff] %v290
  %307 = vst [vmem:[#allocation2 + $0x20] sm:$0xff] %v291
  %308 = vst [vmem:[#allocation2 + $0x28] sm:$0xff] %v292
  %309 = vst [vmem:[#allocation2 + $0x30] sm:$0xff] %v293
  %310 = vst [vmem:[#allocation2 + $0x38] sm:$0xff] %v294
  %311 = vst [vmem:[#allocation2 + $0x40] sm:$0xff] %v295
  %312 = vst [vmem:[#allocation2 + $0x48] sm:$0xff] %v296
  %313 = vst [vmem:[#allocation2 + $0x50] sm:$0xff] %v297
  %314 = vst [vmem:[#allocation2 + $0x58] sm:$0xff] %v298
  %315 = vst [vmem:[#allocation2 + $0x60] sm:$0xff] %v299
  %316 = vst [vmem:[#allocation2 + $0x68] sm:$0xff] %v300
  %317 = vst [vmem:[#allocation2 + $0x70] sm:$0xff] %v301
  %318 = vst [vmem:[#allocation2 + $0x78] sm:$0xff] %v302
  // Predicated region
  $region26: #{gnn_forward.3} parent=0 // pred_check
    %p319 = pneg %p21
  $region27: #{gnn_forward.3} parent=0 // pred_check_branch
    %321 = sbr.rel (%p319) target = $region29
  $region28: #{gnn_forward.3} parent=0 // pred_region
    %v322 = vld [vmem:[#allocation2] sm:$0xff]
    %v323 = vld [vmem:[#allocation2 + $0x8] sm:$0xff]
    %v324 = vld [vmem:[#allocation2 + $0x10] sm:$0xff]
    %v325 = vld [vmem:[#allocation2 + $0x18] sm:$0xff]
    %v326 = vld [vmem:[#allocation2 + $0x20] sm:$0xff]
    %v327 = vld [vmem:[#allocation2 + $0x28] sm:$0xff]
    %v328 = vld [vmem:[#allocation2 + $0x30] sm:$0xff]
    %v329 = vld [vmem:[#allocation2 + $0x38] sm:$0xff]
    %v330 = vld [vmem:[#allocation2 + $0x40] sm:$0xff]
    %v331 = vld [vmem:[#allocation2 + $0x48] sm:$0xff]
    %v332 = vld [vmem:[#allocation2 + $0x50] sm:$0xff]
    %v333 = vld [vmem:[#allocation2 + $0x58] sm:$0xff]
    %v334 = vld [vmem:[#allocation2 + $0x60] sm:$0xff]
    %v335 = vld [vmem:[#allocation2 + $0x68] sm:$0xff]
    %v336 = vld [vmem:[#allocation2 + $0x70] sm:$0xff]
    %v337 = vld [vmem:[#allocation2 + $0x78] sm:$0xff]
    %v338 = vld [vmem:[%s2] sm:$0xff]
    %v339 = vld [vmem:[%s2 + $0x8] sm:$0xff]
    %v340 = vld [vmem:[%s2 + $0x10] sm:$0xff]
    %v341 = vld [vmem:[%s2 + $0x18] sm:$0xff]
    %v342 = vld [vmem:[%s2 + $0x20] sm:$0xff]
    %v343 = vld [vmem:[%s2 + $0x28] sm:$0xff]
    %v344 = vld [vmem:[%s2 + $0x30] sm:$0xff]
    %v345 = vld [vmem:[%s2 + $0x38] sm:$0xff]
    %v346 = vld [vmem:[%s2 + $0x40] sm:$0xff]
    %v347 = vld [vmem:[%s2 + $0x48] sm:$0xff]
    %v348 = vld [vmem:[%s2 + $0x50] sm:$0xff]
    %v349 = vld [vmem:[%s2 + $0x58] sm:$0xff]
    %v350 = vld [vmem:[%s2 + $0x60] sm:$0xff]
    %v351 = vld [vmem:[%s2 + $0x68] sm:$0xff]
    %v352 = vld [vmem:[%s2 + $0x70] sm:$0xff]
    %v353 = vld [vmem:[%s2 + $0x78] sm:$0xff]
    %355 = vset.pattern.permute.xlu0 0
    %356 = vperm.xlu0 %355, %v338
    %v357 = vpop.permute.xlu0 %356
    %360 = vset.pattern.permute.xlu0 0
    %361 = vperm.xlu0 %360, %v339
    %v362 = vpop.permute.xlu0 %361
    %365 = vset.pattern.permute.xlu0 0
    %366 = vperm.xlu0 %365, %v340
    %v367 = vpop.permute.xlu0 %366
    %370 = vset.pattern.permute.xlu0 0
    %371 = vperm.xlu0 %370, %v341
    %v372 = vpop.permute.xlu0 %371
    %375 = vset.pattern.permute.xlu0 0
    %376 = vperm.xlu0 %375, %v342
    %v377 = vpop.permute.xlu0 %376
    %380 = vset.pattern.permute.xlu0 0
    %381 = vperm.xlu0 %380, %v343
    %v382 = vpop.permute.xlu0 %381
    %385 = vset.pattern.permute.xlu0 0
    %386 = vperm.xlu0 %385, %v344
    %v387 = vpop.permute.xlu0 %386
    %390 = vset.pattern.permute.xlu0 0
    %391 = vperm.xlu0 %390, %v345
    %v392 = vpop.permute.xlu0 %391
    %395 = vset.pattern.permute.xlu0 0
    %396 = vperm.xlu0 %395, %v346
    %v397 = vpop.permute.xlu0 %396
    %400 = vset.pattern.permute.xlu0 0
    %401 = vperm.xlu0 %400, %v347
    %v402 = vpop.permute.xlu0 %401
    %405 = vset.pattern.permute.xlu0 0
    %406 = vperm.xlu0 %405, %v348
    %v407 = vpop.permute.xlu0 %406
    %410 = vset.pattern.permute.xlu0 0
    %411 = vperm.xlu0 %410, %v349
    %v412 = vpop.permute.xlu0 %411
    %415 = vset.pattern.permute.xlu0 0
    %416 = vperm.xlu0 %415, %v350
    %v417 = vpop.permute.xlu0 %416
    %420 = vset.pattern.permute.xlu0 0
    %421 = vperm.xlu0 %420, %v351
    %v422 = vpop.permute.xlu0 %421
    %425 = vset.pattern.permute.xlu0 0
    %426 = vperm.xlu0 %425, %v352
    %v427 = vpop.permute.xlu0 %426
    %430 = vset.pattern.permute.xlu0 0
    %431 = vperm.xlu0 %430, %v353
    %v432 = vpop.permute.xlu0 %431
    %v434 = vmul.f32 %v322, %v357
    %v435 = vmul.f32 %v323, %v362
    %v436 = vmul.f32 %v324, %v367
    %v437 = vmul.f32 %v325, %v372
    %v438 = vmul.f32 %v326, %v377
    %v439 = vmul.f32 %v327, %v382
    %v440 = vmul.f32 %v328, %v387
    %v441 = vmul.f32 %v329, %v392
    %v442 = vmul.f32 %v330, %v397
    %v443 = vmul.f32 %v331, %v402
    %v444 = vmul.f32 %v332, %v407
    %v445 = vmul.f32 %v333, %v412
    %v446 = vmul.f32 %v334, %v417
    %v447 = vmul.f32 %v335, %v422
    %v448 = vmul.f32 %v336, %v427
    %v449 = vmul.f32 %v337, %v432
    %v450 = vpack.c.bf16 %v435, %v434
    %v451 = vpack.c.bf16 %v437, %v436
    %v452 = vpack.c.bf16 %v439, %v438
    %v453 = vpack.c.bf16 %v441, %v440
    %v454 = vpack.c.bf16 %v443, %v442
    %v455 = vpack.c.bf16 %v445, %v444
    %v456 = vpack.c.bf16 %v447, %v446
    %v457 = vpack.c.bf16 %v449, %v448
    %s458 = smul.u32 0, 128
    %s459 = sshra.s32 %s458, 3
    %s460 = sand.u32 %s458, 7
    %s461 = smul.addr %s459, 4
    %s462 = scalar_lea.vmem %s1, %s461
    %v463 = vld [vmem:[%s462] sm:$0xf]
    %v464 = vld [vmem:[%s462 + $0x4] sm:$0xf]
    %v465 = vld [vmem:[%s462 + $0x8] sm:$0xf]
    %v466 = vld [vmem:[%s462 + $0xc] sm:$0xf]
    %v467 = vld [vmem:[%s462 + $0x10] sm:$0xf]
    %v468 = vld [vmem:[%s462 + $0x14] sm:$0xf]
    %v469 = vld [vmem:[%s462 + $0x18] sm:$0xf]
    %v470 = vld [vmem:[%s462 + $0x1c] sm:$0xf]
    %v471 = vld [vmem:[%s462 + $0x20] sm:$0xf]
    %v472 = vld [vmem:[%s462 + $0x24] sm:$0xf]
    %v473 = vld [vmem:[%s462 + $0x28] sm:$0xf]
    %v474 = vld [vmem:[%s462 + $0x2c] sm:$0xf]
    %v475 = vld [vmem:[%s462 + $0x30] sm:$0xf]
    %v476 = vld [vmem:[%s462 + $0x34] sm:$0xf]
    %v477 = vld [vmem:[%s462 + $0x38] sm:$0xf]
    %v478 = vld [vmem:[%s462 + $0x3c] sm:$0xf]
    %v479 = vld [vmem:[%s3] sm:$0xf]
    %v480 = vld [vmem:[%s3 + $0x4] sm:$0xf]
    %v481 = vld [vmem:[%s3 + $0x8] sm:$0xf]
    %v482 = vld [vmem:[%s3 + $0xc] sm:$0xf]
    %v483 = vld [vmem:[%s3 + $0x10] sm:$0xf]
    %v484 = vld [vmem:[%s3 + $0x14] sm:$0xf]
    %v485 = vld [vmem:[%s3 + $0x18] sm:$0xf]
    %v486 = vld [vmem:[%s3 + $0x1c] sm:$0xf]
    %v487 = vld [vmem:[%s3 + $0x20] sm:$0xf]
    %v488 = vld [vmem:[%s3 + $0x24] sm:$0xf]
    %v489 = vld [vmem:[%s3 + $0x28] sm:$0xf]
    %v490 = vld [vmem:[%s3 + $0x2c] sm:$0xf]
    %v491 = vld [vmem:[%s3 + $0x30] sm:$0xf]
    %v492 = vld [vmem:[%s3 + $0x34] sm:$0xf]
    %v493 = vld [vmem:[%s3 + $0x38] sm:$0xf]
    %v494 = vld [vmem:[%s3 + $0x3c] sm:$0xf]
    %v495 = vld [vmem:[%s3 + $0x40] sm:$0xf]
    %v496 = vld [vmem:[%s3 + $0x44] sm:$0xf]
    %v497 = vld [vmem:[%s3 + $0x48] sm:$0xf]
    %v498 = vld [vmem:[%s3 + $0x4c] sm:$0xf]
    %v499 = vld [vmem:[%s3 + $0x50] sm:$0xf]
    %v500 = vld [vmem:[%s3 + $0x54] sm:$0xf]
    %v501 = vld [vmem:[%s3 + $0x58] sm:$0xf]
    %v502 = vld [vmem:[%s3 + $0x5c] sm:$0xf]
    %v503 = vld [vmem:[%s3 + $0x60] sm:$0xf]
    %v504 = vld [vmem:[%s3 + $0x64] sm:$0xf]
    %v505 = vld [vmem:[%s3 + $0x68] sm:$0xf]
    %v506 = vld [vmem:[%s3 + $0x6c] sm:$0xf]
    %v507 = vld [vmem:[%s3 + $0x70] sm:$0xf]
    %v508 = vld [vmem:[%s3 + $0x74] sm:$0xf]
    %v509 = vld [vmem:[%s3 + $0x78] sm:$0xf]
    %v510 = vld [vmem:[%s3 + $0x7c] sm:$0xf]
    %v527 = vunpack.c.l.b16 %v463
    %v528 = vunpack.c.l.b16 %v464
    %v529 = vunpack.c.l.b16 %v465
    %v530 = vunpack.c.l.b16 %v466
    %v531 = vunpack.c.l.b16 %v467
    %v532 = vunpack.c.l.b16 %v468
    %v533 = vunpack.c.l.b16 %v469
    %v534 = vunpack.c.l.b16 %v470
    %v535 = vunpack.c.l.b16 %v471
    %v536 = vunpack.c.l.b16 %v472
    %v537 = vunpack.c.l.b16 %v473
    %v538 = vunpack.c.l.b16 %v474
    %v539 = vunpack.c.l.b16 %v475
    %v540 = vunpack.c.l.b16 %v476
    %v541 = vunpack.c.l.b16 %v477
    %v542 = vunpack.c.l.b16 %v478
    %v543 = vpack.c.b16 %v528, %v527
    %v544 = vpack.c.b16 %v530, %v529
    %v545 = vpack.c.b16 %v532, %v531
    %v546 = vpack.c.b16 %v534, %v533
    %v547 = vpack.c.b16 %v536, %v535
    %v548 = vpack.c.b16 %v538, %v537
    %v549 = vpack.c.b16 %v540, %v539
    %v550 = vpack.c.b16 %v542, %v541
    %v575 = vunpack.c.l.b16 %v495
    %v576 = vunpack.c.l.b16 %v496
    %v577 = vunpack.c.l.b16 %v497
    %v578 = vunpack.c.l.b16 %v498
    %v579 = vunpack.c.l.b16 %v499
    %v580 = vunpack.c.l.b16 %v500
    %v581 = vunpack.c.l.b16 %v501
    %v582 = vunpack.c.l.b16 %v502
    %v583 = vunpack.c.l.b16 %v503
    %v584 = vunpack.c.l.b16 %v504
    %v585 = vunpack.c.l.b16 %v505
    %v586 = vunpack.c.l.b16 %v506
    %v587 = vunpack.c.l.b16 %v507
    %v588 = vunpack.c.l.b16 %v508
    %v589 = vunpack.c.l.b16 %v509
    %v590 = vunpack.c.l.b16 %v510
    %v591 = vpack.c.b16 %v576, %v575
    %v592 = vpack.c.b16 %v578, %v577
    %v593 = vpack.c.b16 %v580, %v579
    %v594 = vpack.c.b16 %v582, %v581
    %v595 = vpack.c.b16 %v584, %v583
    %v596 = vpack.c.b16 %v586, %v585
    %v597 = vpack.c.b16 %v588, %v587
    %v598 = vpack.c.b16 %v590, %v589
    %607 = vmatprep.subr.bf16.mxu0 0
    %608 = vmatpush1.bf16.msra.mxu0 %v598
    %609 = vmatprep.subr.bf16.mxu0 0
    %610 = vmatpush1.bf16.msra.mxu0 %v597
    %611 = vmatprep.subr.bf16.mxu0 0
    %612 = vmatpush1.bf16.msra.mxu0 %v596
    %613 = vmatprep.subr.bf16.mxu0 0
    %614 = vmatpush1.bf16.msra.mxu0 %v595
    %615 = vmatprep.subr.bf16.mxu0 0
    %616 = vmatpush1.bf16.msra.mxu0 %v594
    %617 = vmatprep.subr.bf16.mxu0 0
    %618 = vmatpush1.bf16.msra.mxu0 %v593
    %619 = vmatprep.subr.bf16.mxu0 0
    %620 = vmatpush1.bf16.msra.mxu0 %v592
    %621 = vmatprep.subr.bf16.mxu0 0
    %622 = vmatpush1.bf16.msra.mxu0 %v591
    %623 = vmatprep.subr.bf16.mxu0 0
    %624 = vmatpush2.bf16.msra.mxu0 0
    %625 = vmatprep.subr.bf16.mxu0 0
    %626 = vmatpush2.bf16.msra.mxu0 0
    %627 = vmatprep.subr.bf16.mxu0 0
    %628 = vmatpush2.bf16.msra.mxu0 0
    %629 = vmatprep.subr.bf16.mxu0 0
    %630 = vmatpush2.bf16.msra.mxu0 0
    %631 = vmatprep.subr.bf16.mxu0 0
    %632 = vmatpush2.bf16.msra.mxu0 0
    %633 = vmatprep.subr.bf16.mxu0 0
    %634 = vmatpush2.bf16.msra.mxu0 0
    %635 = vmatprep.subr.bf16.mxu0 0
    %636 = vmatpush2.bf16.msra.mxu0 0
    %637 = vmatprep.subr.bf16.mxu0 0
    %638 = vmatpush2.bf16.msra.mxu0 0
    %639 = vmatprep.mubr.bf16.mxu0 0
    %640 = vmatmul.mubr.bf16.gmra.mxu0 %v543
    %v641 = vpop.f32.mrf.mxu0
    %v642 = vadd.f32 0.0, %v641
    %v643 = vpop.f32.mrf.mxu0
    %v644 = vpop.f32.mrf.mxu0
    %v645 = vadd.f32 0.0, %v644
    %v646 = vpop.f32.mrf.mxu0
    %647 = vmatprep.mubr.bf16.mxu0 0
    %648 = vmatmul.mubr.bf16.gmra.mxu0 %v544
    %v649 = vpop.f32.mrf.mxu0
    %v650 = vadd.f32 0.0, %v649
    %v651 = vpop.f32.mrf.mxu0
    %v652 = vpop.f32.mrf.mxu0
    %v653 = vadd.f32 0.0, %v652
    %v654 = vpop.f32.mrf.mxu0
    %655 = vmatprep.mubr.bf16.mxu0 0
    %656 = vmatmul.mubr.bf16.gmra.mxu0 %v545
    %v657 = vpop.f32.mrf.mxu0
    %v658 = vadd.f32 0.0, %v657
    %v659 = vpop.f32.mrf.mxu0
    %v660 = vpop.f32.mrf.mxu0
    %v661 = vadd.f32 0.0, %v660
    %v662 = vpop.f32.mrf.mxu0
    %663 = vmatprep.mubr.bf16.mxu0 0
    %664 = vmatmul.mubr.bf16.gmra.mxu0 %v546
    %v665 = vpop.f32.mrf.mxu0
    %v666 = vadd.f32 0.0, %v665
    %v667 = vpop.f32.mrf.mxu0
    %v668 = vpop.f32.mrf.mxu0
    %v669 = vadd.f32 0.0, %v668
    %v670 = vpop.f32.mrf.mxu0
    %671 = vmatprep.mubr.bf16.mxu0 0
    %672 = vmatmul.mubr.bf16.gmra.mxu0 %v547
    %v673 = vpop.f32.mrf.mxu0
    %v674 = vadd.f32 0.0, %v673
    %v675 = vpop.f32.mrf.mxu0
    %v676 = vpop.f32.mrf.mxu0
    %v677 = vadd.f32 0.0, %v676
    %v678 = vpop.f32.mrf.mxu0
    %679 = vmatprep.mubr.bf16.mxu0 0
    %680 = vmatmul.mubr.bf16.gmra.mxu0 %v548
    %v681 = vpop.f32.mrf.mxu0
    %v682 = vadd.f32 0.0, %v681
    %v683 = vpop.f32.mrf.mxu0
    %v684 = vpop.f32.mrf.mxu0
    %v685 = vadd.f32 0.0, %v684
    %v686 = vpop.f32.mrf.mxu0
    %687 = vmatprep.mubr.bf16.mxu0 0
    %688 = vmatmul.mubr.bf16.gmra.mxu0 %v549
    %v689 = vpop.f32.mrf.mxu0
    %v690 = vadd.f32 0.0, %v689
    %v691 = vpop.f32.mrf.mxu0
    %v692 = vpop.f32.mrf.mxu0
    %v693 = vadd.f32 0.0, %v692
    %v694 = vpop.f32.mrf.mxu0
    %695 = vmatprep.mubr.bf16.mxu0 0
    %696 = vmatmul.mubr.bf16.gmra.mxu0 %v550
    %v697 = vpop.f32.mrf.mxu0
    %v698 = vadd.f32 0.0, %v697
    %v699 = vpop.f32.mrf.mxu0
    %v700 = vpop.f32.mrf.mxu0
    %v701 = vadd.f32 0.0, %v700
    %v702 = vpop.f32.mrf.mxu0
    %703 = vdwg.mxu0
    %v720 = vunpack.c.l.b16 %v479
    %v721 = vunpack.c.l.b16 %v480
    %v722 = vunpack.c.l.b16 %v481
    %v723 = vunpack.c.l.b16 %v482
    %v724 = vunpack.c.l.b16 %v483
    %v725 = vunpack.c.l.b16 %v484
    %v726 = vunpack.c.l.b16 %v485
    %v727 = vunpack.c.l.b16 %v486
    %v728 = vunpack.c.l.b16 %v487
    %v729 = vunpack.c.l.b16 %v488
    %v730 = vunpack.c.l.b16 %v489
    %v731 = vunpack.c.l.b16 %v490
    %v732 = vunpack.c.l.b16 %v491
    %v733 = vunpack.c.l.b16 %v492
    %v734 = vunpack.c.l.b16 %v493
    %v735 = vunpack.c.l.b16 %v494
    %v736 = vpack.c.b16 %v721, %v720
    %v737 = vpack.c.b16 %v723, %v722
    %v738 = vpack.c.b16 %v725, %v724
    %v739 = vpack.c.b16 %v727, %v726
    %v740 = vpack.c.b16 %v729, %v728
    %v741 = vpack.c.b16 %v731, %v730
    %v742 = vpack.c.b16 %v733, %v732
    %v743 = vpack.c.b16 %v735, %v734
    %752 = vmatprep.subr.bf16.mxu0 0
    %753 = vmatpush1.bf16.msra.mxu0 %v743
    %754 = vmatprep.subr.bf16.mxu0 0
    %755 = vmatpush1.bf16.msra.mxu0 %v742
    %756 = vmatprep.subr.bf16.mxu0 0
    %757 = vmatpush1.bf16.msra.mxu0 %v741
    %758 = vmatprep.subr.bf16.mxu0 0
    %759 = vmatpush1.bf16.msra.mxu0 %v740
    %760 = vmatprep.subr.bf16.mxu0 0
    %761 = vmatpush1.bf16.msra.mxu0 %v739
    %762 = vmatprep.subr.bf16.mxu0 0
    %763 = vmatpush1.bf16.msra.mxu0 %v738
    %764 = vmatprep.subr.bf16.mxu0 0
    %765 = vmatpush1.bf16.msra.mxu0 %v737
    %766 = vmatprep.subr.bf16.mxu0 0
    %767 = vmatpush1.bf16.msra.mxu0 %v736
    %768 = vmatprep.subr.bf16.mxu0 0
    %769 = vmatpush2.bf16.msra.mxu0 0
    %770 = vmatprep.subr.bf16.mxu0 0
    %771 = vmatpush2.bf16.msra.mxu0 0
    %772 = vmatprep.subr.bf16.mxu0 0
    %773 = vmatpush2.bf16.msra.mxu0 0
    %774 = vmatprep.subr.bf16.mxu0 0
    %775 = vmatpush2.bf16.msra.mxu0 0
    %776 = vmatprep.subr.bf16.mxu0 0
    %777 = vmatpush2.bf16.msra.mxu0 0
    %778 = vmatprep.subr.bf16.mxu0 0
    %779 = vmatpush2.bf16.msra.mxu0 0
    %780 = vmatprep.subr.bf16.mxu0 0
    %781 = vmatpush2.bf16.msra.mxu0 0
    %782 = vmatprep.subr.bf16.mxu0 0
    %783 = vmatpush2.bf16.msra.mxu0 0
    %784 = vmatprep.mubr.bf16.mxu0 0
    %785 = vmatmul.mubr.bf16.gmra.mxu0 %v450
    %v786 = vpop.f32.mrf.mxu0
    %v787 = vadd.f32 %v642, %v786
    %v788 = vpop.f32.mrf.mxu0
    %v789 = vpop.f32.mrf.mxu0
    %v790 = vadd.f32 %v645, %v789
    %v791 = vpop.f32.mrf.mxu0
    %792 = vmatprep.mubr.bf16.mxu0 0
    %793 = vmatmul.mubr.bf16.gmra.mxu0 %v451
    %v794 = vpop.f32.mrf.mxu0
    %v795 = vadd.f32 %v650, %v794
    %v796 = vpop.f32.mrf.mxu0
    %v797 = vpop.f32.mrf.mxu0
    %v798 = vadd.f32 %v653, %v797
    %v799 = vpop.f32.mrf.mxu0
    %800 = vmatprep.mubr.bf16.mxu0 0
    %801 = vmatmul.mubr.bf16.gmra.mxu0 %v452
    %v802 = vpop.f32.mrf.mxu0
    %v803 = vadd.f32 %v658, %v802
    %v804 = vpop.f32.mrf.mxu0
    %v805 = vpop.f32.mrf.mxu0
    %v806 = vadd.f32 %v661, %v805
    %v807 = vpop.f32.mrf.mxu0
    %808 = vmatprep.mubr.bf16.mxu0 0
    %809 = vmatmul.mubr.bf16.gmra.mxu0 %v453
    %v810 = vpop.f32.mrf.mxu0
    %v811 = vadd.f32 %v666, %v810
    %v812 = vpop.f32.mrf.mxu0
    %v813 = vpop.f32.mrf.mxu0
    %v814 = vadd.f32 %v669, %v813
    %v815 = vpop.f32.mrf.mxu0
    %816 = vmatprep.mubr.bf16.mxu0 0
    %817 = vmatmul.mubr.bf16.gmra.mxu0 %v454
    %v818 = vpop.f32.mrf.mxu0
    %v819 = vadd.f32 %v674, %v818
    %v820 = vpop.f32.mrf.mxu0
    %v821 = vpop.f32.mrf.mxu0
    %v822 = vadd.f32 %v677, %v821
    %v823 = vpop.f32.mrf.mxu0
    %824 = vmatprep.mubr.bf16.mxu0 0
    %825 = vmatmul.mubr.bf16.gmra.mxu0 %v455
    %v826 = vpop.f32.mrf.mxu0
    %v827 = vadd.f32 %v682, %v826
    %v828 = vpop.f32.mrf.mxu0
    %v829 = vpop.f32.mrf.mxu0
    %v830 = vadd.f32 %v685, %v829
    %v831 = vpop.f32.mrf.mxu0
    %832 = vmatprep.mubr.bf16.mxu0 0
    %833 = vmatmul.mubr.bf16.gmra.mxu0 %v456
    %v834 = vpop.f32.mrf.mxu0
    %v835 = vadd.f32 %v690, %v834
    %v836 = vpop.f32.mrf.mxu0
    %v837 = vpop.f32.mrf.mxu0
    %v838 = vadd.f32 %v693, %v837
    %v839 = vpop.f32.mrf.mxu0
    %840 = vmatprep.mubr.bf16.mxu0 0
    %841 = vmatmul.mubr.bf16.gmra.mxu0 %v457
    %v842 = vpop.f32.mrf.mxu0
    %v843 = vadd.f32 %v698, %v842
    %v844 = vpop.f32.mrf.mxu0
    %v845 = vpop.f32.mrf.mxu0
    %v846 = vadd.f32 %v701, %v845
    %v847 = vpop.f32.mrf.mxu0
    %848 = vdwg.mxu0
    %v849 = vld [vmem:[%s4] sm:$0x1]
    %v851 = vlaneseq
    %v852 = vshrl.u32 %v851, 7
    %v853 = vsub.s32 0, %v852
    %v854 = vrot.slane %v849, %v853
    %v856 = vadd.f32 %v787, %v854
    %v857 = vadd.f32 %v790, %v854
    %v858 = vadd.f32 %v795, %v854
    %v859 = vadd.f32 %v798, %v854
    %v860 = vadd.f32 %v803, %v854
    %v861 = vadd.f32 %v806, %v854
    %v862 = vadd.f32 %v811, %v854
    %v863 = vadd.f32 %v814, %v854
    %v864 = vadd.f32 %v819, %v854
    %v865 = vadd.f32 %v822, %v854
    %v866 = vadd.f32 %v827, %v854
    %v867 = vadd.f32 %v830, %v854
    %v868 = vadd.f32 %v835, %v854
    %v869 = vadd.f32 %v838, %v854
    %v870 = vadd.f32 %v843, %v854
    %v871 = vadd.f32 %v846, %v854
    %872 = vst [vmem:[%s5] sm:$0xff] %v856
    %873 = vst [vmem:[%s5 + $0x8] sm:$0xff] %v857
    %874 = vst [vmem:[%s5 + $0x10] sm:$0xff] %v858
    %875 = vst [vmem:[%s5 + $0x18] sm:$0xff] %v859
    %876 = vst [vmem:[%s5 + $0x20] sm:$0xff] %v860
    %877 = vst [vmem:[%s5 + $0x28] sm:$0xff] %v861
    %878 = vst [vmem:[%s5 + $0x30] sm:$0xff] %v862
    %879 = vst [vmem:[%s5 + $0x38] sm:$0xff] %v863
    %880 = vst [vmem:[%s5 + $0x40] sm:$0xff] %v864
    %881 = vst [vmem:[%s5 + $0x48] sm:$0xff] %v865
    %882 = vst [vmem:[%s5 + $0x50] sm:$0xff] %v866
    %883 = vst [vmem:[%s5 + $0x58] sm:$0xff] %v867
    %884 = vst [vmem:[%s5 + $0x60] sm:$0xff] %v868
    %885 = vst [vmem:[%s5 + $0x68] sm:$0xff] %v869
    %886 = vst [vmem:[%s5 + $0x70] sm:$0xff] %v870
    %887 = vst [vmem:[%s5 + $0x78] sm:$0xff] %v871
  $region29: #{gnn_forward.3} parent=0 // pred_fallthru
    _
  // Predicated region
  $region30: #{gnn_forward.3} parent=0 // pred_check
    _
  $region31: #{gnn_forward.3} parent=0 // pred_check_branch
    %889 = sbr.rel (0) target = $region33
  $region32: #{gnn_forward.3} parent=0 // pred_region
    _
  $region33: #{gnn_forward.3} parent=0 // pred_fallthru
    _
  // Predicated region
  $region34: #{gnn_forward.3} parent=0 // pred_check
    _
  $region35: #{gnn_forward.3} parent=0 // pred_check_branch
    %891 = sbr.rel (0) target = $region37
  $region36: #{gnn_forward.3} parent=0 // pred_region
    _
  $region37: #{gnn_forward.3} parent=0 // pred_fallthru
    _

</llo_original>
